<compile_context>
chip_gen: v7x
topology: tpu7x:2x2x1
jax: 0.10.0
libtpu: 0.0.40
codegen_flags: <defaults>
</compile_context>

<pallas_src>
import numpy as np
import jax
import jax.numpy as jnp
from jax.experimental import pallas as pl
from jax.experimental.pallas import tpu as pltpu


# -----------------------------------------------------------------------------
# Pallas kernel 1: fused 3x3 morphology (dilate / erode / close).
#
# dilate == 3x3 max with zero padding   (== (conv2d(x, ones, pad=1) > 0) for
#                                         binary x, as in the module)
# erode  == 3x3 min with ONE  padding   (== 1 - (conv2d(1-x, ones, pad=1) > 0):
#                                         out-of-image counts as foreground,
#                                         matching the module's erode exactly)
# Both are separable: sublane rolls (rows) then lane rolls (cols), with rolled
# wrap values masked via (H,1)/(1,W) iota edge masks — no 258-wide unaligned
# pre-pad.  close() = dilate+erode fused in one dispatch (no intermediate HBM).
# -----------------------------------------------------------------------------
def _edge_masks(H, W):
    rows = jax.lax.broadcasted_iota(jnp.int32, (H, 1), 0)
    cols = jax.lax.broadcasted_iota(jnp.int32, (1, W), 1)
    return rows > 0, rows < H - 1, cols > 0, cols < W - 1


def _dilate3(x, not_top, not_bot, not_left, not_right):
    H, W = x.shape
    up    = jnp.where(not_top,   pltpu.roll(x, 1,     axis=0), 0.0)   # x[i-1, j]
    down  = jnp.where(not_bot,   pltpu.roll(x, H - 1, axis=0), 0.0)   # x[i+1, j]
    r = jnp.maximum(x, jnp.maximum(up, down))
    left  = jnp.where(not_left,  pltpu.roll(r, 1,     axis=1), 0.0)   # r[i, j-1]
    right = jnp.where(not_right, pltpu.roll(r, W - 1, axis=1), 0.0)   # r[i, j+1]
    return jnp.maximum(r, jnp.maximum(left, right))


def _erode3(x, not_top, not_bot, not_left, not_right):
    H, W = x.shape
    up    = jnp.where(not_top,   pltpu.roll(x, 1,     axis=0), 1.0)
    down  = jnp.where(not_bot,   pltpu.roll(x, H - 1, axis=0), 1.0)
    r = jnp.minimum(x, jnp.minimum(up, down))
    left  = jnp.where(not_left,  pltpu.roll(r, 1,     axis=1), 1.0)
    right = jnp.where(not_right, pltpu.roll(r, W - 1, axis=1), 1.0)
    return jnp.minimum(r, jnp.minimum(left, right))


def _dilate_kernel(x_ref, o_ref):
    H, W = o_ref.shape
    masks = _edge_masks(H, W)
    o_ref[...] = _dilate3(x_ref[...], *masks)


def _erode_kernel(x_ref, o_ref):
    H, W = o_ref.shape
    masks = _edge_masks(H, W)
    o_ref[...] = _erode3(x_ref[...], *masks)


def _close_kernel(x_ref, o_ref):
    # dilate then erode fused into one dispatch; edge masks built once, reused.
    H, W = o_ref.shape
    masks = _edge_masks(H, W)
    d = _dilate3(x_ref[...], *masks)
    o_ref[...] = _erode3(d, *masks)


def _run_plane(kernel, x2d):
    x2d = jnp.asarray(x2d, jnp.float32)
    H, W = x2d.shape
    return pl.pallas_call(
        kernel,
        out_shape=jax.ShapeDtypeStruct((H, W), jnp.float32),
        grid=(1,),
        in_specs=[pl.BlockSpec((H, W), lambda i: (0, 0))],
        out_specs=pl.BlockSpec((H, W), lambda i: (0, 0)),
    )(x2d)


def dilate(x2d):
    return _run_plane(_dilate_kernel, x2d)


def erode(x2d):
    return _run_plane(_erode_kernel, x2d)


def morphology_close(x2d):
    return _run_plane(_close_kernel, x2d)


# -----------------------------------------------------------------------------
# Pallas kernel 2: broadcast masked multiply  Y(B, C, H, W) * M(1, 1, H, W).
#
# Fixed ~3 MiB block of whole (H, W) planes; mask has a constant block index so
# it is fetched once and stays VMEM-resident across grid steps.  Output aliases
# the input buffer (in-place multiply) -> one HBM read + one HBM write of X and
# no extra output allocation.  On v7x the plane count is capped so the grid has
# >= 2 steps and the "parallel" axis shards across both TensorCores.
# -----------------------------------------------------------------------------
_BLOCK_BYTES_CAP = 3 * 1024 * 1024   # ~3 MiB: 2*(in+out)+mask fits v5e's 16 MiB
                                     # scoped-VMEM default with headroom.


def _tensorcores_per_chip():
    # v7x has 2 TensorCores per chip; v5e / v6e have 1.
    try:
        kind = jax.devices()[0].device_kind.lower()
    except Exception:
        return 1
    return 2 if "v7" in kind else 1


def _mask_mul_kernel(x_ref, m_ref, o_ref):
    o_ref[...] = x_ref[...] * m_ref[...][None, :, :]


def masked_mul(y, mask_fan):
    B, C, H, W = y.shape
    n = B * C
    y2 = y.reshape(n, H, W)
    m2 = mask_fan.reshape(H, W).astype(y.dtype)

    plane_bytes = H * W * y.dtype.itemsize
    # Fixed plane count per block (~3 MiB); partial trailing blocks are fine for
    # an elementwise op (OOB reads are discarded on write).  Cap so the grid has
    # at least one step per TensorCore ("parallel" then shards on v7x).
    p = max(1, _BLOCK_BYTES_CAP // plane_bytes)
    p = min(p, max(1, pl.cdiv(n, _tensorcores_per_chip())))
    grid = (pl.cdiv(n, p),)

    out = pl.pallas_call(
        _mask_mul_kernel,
        out_shape=jax.ShapeDtypeStruct((n, H, W), y.dtype),
        grid=grid,
        in_specs=[
            pl.BlockSpec((p, H, W), lambda i: (i, 0, 0)),
            pl.BlockSpec((H, W), lambda i: (0, 0)),   # constant -> mask stays resident
        ],
        out_specs=pl.BlockSpec((p, H, W), lambda i: (i, 0, 0)),
        input_output_aliases={0: 0},                  # in-place: no extra HBM alloc
        compiler_params=pltpu.CompilerParams(
            dimension_semantics=("parallel",)),
    )(y2, m2)
    return out.reshape(B, C, H, W)


# -----------------------------------------------------------------------------
# init_grids / compute_grid / compute_grid_inverse / normalize_grid
# (init-time only; pure indexing on host, mask closing on device via Pallas).
# -----------------------------------------------------------------------------
def compute_grid(w, h, center_x, center_y, r1, r2, theta):
    angles = np.linspace(-theta, theta, w, dtype=np.float32)
    radii = np.linspace(r1, r2, h, dtype=np.float32)
    x = center_x + radii[:, None] * np.sin(angles)[None, :]
    y = center_y + radii[:, None] * np.cos(angles)[None, :]
    return np.stack([x, y], axis=-1).astype(np.float32)          # (h, w, 2)


def compute_grid_inverse(grid):
    h, w, _ = grid.shape
    inverse_grid = np.zeros((h, w, 2), np.float32)
    mask = np.zeros((h, w), np.float32)
    rounded = np.rint(grid).astype(np.int64)                      # torch.round (half-to-even)
    xi, yi = rounded[..., 0], rounded[..., 1]
    jj, ii = np.meshgrid(np.arange(h), np.arange(w), indexing="ij")
    valid = (xi >= 0) & (xi < w) & (yi >= 0) & (yi < h)
    # NOTE: duplicate rounded targets resolve last-write-wins in row-major
    # (j outer, i inner) order — same as the sequential torch loops.
    yv, xv = yi[valid], xi[valid]
    inverse_grid[yv, xv, 0] = ii[valid].astype(np.float32)
    inverse_grid[yv, xv, 1] = jj[valid].astype(np.float32)
    mask[yv, xv] = 1.0
    mask_closed = morphology_close(mask)                          # fused Pallas kernel
    return inverse_grid, mask_closed[None]                        # (1, h, w), on device


def normalize_grid(grid):
    h, w, _ = grid.shape
    return grid / np.array([h, w], np.float32) * 2.0 - 1.0


def init_grids(w, h, center_x, center_y, r1, r2, theta):
    grid = compute_grid(w, h, center_x, center_y, r1, r2, theta)
    inverse_grid, mask = compute_grid_inverse(grid)
    return (jnp.asarray(normalize_grid(grid)),
            jnp.asarray(normalize_grid(inverse_grid)),
            mask)


# -----------------------------------------------------------------------------
# Forward: MergedGuidedAnim.forward == USR(X, ...) * mask_fan  (no G/transforms).
# X is donated so the in-place masked multiply reuses X's HBM buffer.  When USR
# becomes a real Pallas kernel, fuse the mask multiply into its epilogue and
# drop this standalone pass entirely.
# -----------------------------------------------------------------------------
# TODO(synk): UltrasoundRenderingLinear (USR, num_labels=333) is a
# checkpoint/CSV-backed renderer whose weights are not reproducible from the
# module source; identity placeholder preserves the wrapper's dataflow.
def _usr(x, grid, inverse_grid, mask_fan):
    del grid, inverse_grid, mask_fan
    return x


def _forward(X, grid, inverse_grid, mask_fan):
    X = _usr(X, grid, inverse_grid, mask_fan)
    return masked_mul(X, mask_fan)        # single Pallas pass: load X, load mask, store


forward = jax.jit(_forward, donate_argnums=(0,))


# -----------------------------------------------------------------------------
if __name__ == "__main__":
    H = W = 256                           # fixed by the module (grid_w = grid_h = 256)
    B, C = 2, 1

    key = jax.random.PRNGKey(0)
    X = jax.random.normal(key, (B, C, H, W), dtype=jnp.float32)

    # MergedGuidedAnim's USR construction parameters.
    grid, inverse_grid, mask = init_grids(
        W, H, center_x=128.0, center_y=-30.0, r1=20.0, r2=215.0,
        theta=float(np.pi / 4.0))
    mask_fan = mask[None]                 # (1, 1, H, W)

    # Snapshot inputs on host BEFORE forward: X is donated (buffer reused).
    X_np = np.asarray(X)
    mask_np = np.asarray(mask_fan)

    out = forward(X, grid, inverse_grid, mask_fan)
    jax.block_until_ready(out)
    assert out.shape == (B, C, H, W), out.shape

    # --- light correctness checks against pure numpy references --------------
    # 1) masked multiply
    np.testing.assert_allclose(np.asarray(out), X_np * mask_np)

    # 2) fused morphology-close kernel vs zero-padded numpy 3x3 reference
    def _box_np(a):
        p = np.pad(a, 1)
        return sum(p[i:i + a.shape[0], j:j + a.shape[1]]
                   for i in range(3) for j in range(3))

    m_test = (jax.random.uniform(jax.random.PRNGKey(1), (H, W)) > 0.7)
    m_test = m_test.astype(jnp.float32)
    m_np = np.asarray(m_test)
    d_ref = (_box_np(m_np) > 0).astype(np.float32)
    close_ref = 1.0 - (_box_np(1.0 - d_ref) > 0).astype(np.float32)
    np.testing.assert_array_equal(np.asarray(morphology_close(m_test)), close_ref)
    np.testing.assert_array_equal(np.asarray(dilate(m_test)), d_ref)

    print("KERNEL_OK")
</pallas_src>

<mosaic_0001>
module attributes {stable_mosaic.version = 11 : i64} {
  func.func @_close_kernel(%arg0: i32, %arg1: memref<256x256xf32, #tpu.memory_space<vmem>>, %arg2: memref<256x256xf32, #tpu.memory_space<vmem>>) attributes {dimension_semantics = [#tpu.dimension_semantics<arbitrary>], iteration_bounds = array<i64: 1>, scalar_prefetch = 0 : i64, scratch_operands = 0 : i64, tpu.core_type = #tpu.core_type<tc>, window_params = [{pipeline_mode = #tpu.pipeline_mode<synchronous>, transform_indices = @transform_0, window_bounds = array<i64: 256, 256>}, {pipeline_mode = #tpu.pipeline_mode<synchronous>, transform_indices = @transform_1, window_bounds = array<i64: 256, 256>}]} {
    %0 = tpu.iota {dimensions = array<i32: 0>} : vector<256x1xi32>
    %1 = tpu.iota {dimensions = array<i32: 1>} : vector<1x256xi32>
    %c0_i32 = arith.constant 0 : i32
    %2 = vector.broadcast %c0_i32 : i32 to vector<256x1xi32>
    %3 = arith.cmpi sgt, %0, %2 : vector<256x1xi32>
    %c255_i32 = arith.constant 255 : i32
    %4 = vector.broadcast %c255_i32 : i32 to vector<256x1xi32>
    %5 = arith.cmpi slt, %0, %4 : vector<256x1xi32>
    %c0_i32_0 = arith.constant 0 : i32
    %6 = vector.broadcast %c0_i32_0 : i32 to vector<1x256xi32>
    %7 = arith.cmpi sgt, %1, %6 : vector<1x256xi32>
    %c255_i32_1 = arith.constant 255 : i32
    %8 = vector.broadcast %c255_i32_1 : i32 to vector<1x256xi32>
    %9 = arith.cmpi slt, %1, %8 : vector<1x256xi32>
    %c0 = arith.constant 0 : index
    %c0_2 = arith.constant 0 : index
    %10 = vector.load %arg1[%c0, %c0_2] : memref<256x256xf32, #tpu.memory_space<vmem>>, vector<256x256xf32>
    %c1_i32 = arith.constant 1 : i32
    %11 = tpu.dynamic_rotate %10 by %c1_i32 dim 0 : vector<256x256xf32>, i32 -> vector<256x256xf32>
    %cst = arith.constant 0.000000e+00 : f32
    %12 = vector.shape_cast %3 : vector<256x1xi1> to vector<256x1xi1>
    %13 = vector.broadcast %12 : vector<256x1xi1> to vector<256x256xi1>
    %14 = vector.broadcast %cst : f32 to vector<256x256xf32>
    %15 = arith.select %13, %11, %14 : vector<256x256xi1>, vector<256x256xf32>
    %c255_i32_3 = arith.constant 255 : i32
    %16 = tpu.dynamic_rotate %10 by %c255_i32_3 dim 0 : vector<256x256xf32>, i32 -> vector<256x256xf32>
    %cst_4 = arith.constant 0.000000e+00 : f32
    %17 = vector.shape_cast %5 : vector<256x1xi1> to vector<256x1xi1>
    %18 = vector.broadcast %17 : vector<256x1xi1> to vector<256x256xi1>
    %19 = vector.broadcast %cst_4 : f32 to vector<256x256xf32>
    %20 = arith.select %18, %16, %19 : vector<256x256xi1>, vector<256x256xf32>
    %21 = arith.maximumf %15, %20 : vector<256x256xf32>
    %22 = arith.maximumf %10, %21 : vector<256x256xf32>
    %c1_i32_5 = arith.constant 1 : i32
    %23 = tpu.dynamic_rotate %22 by %c1_i32_5 dim 1 : vector<256x256xf32>, i32 -> vector<256x256xf32>
    %cst_6 = arith.constant 0.000000e+00 : f32
    %24 = vector.shape_cast %7 : vector<1x256xi1> to vector<1x256xi1>
    %25 = vector.broadcast %24 : vector<1x256xi1> to vector<256x256xi1>
    %26 = vector.broadcast %cst_6 : f32 to vector<256x256xf32>
    %27 = arith.select %25, %23, %26 : vector<256x256xi1>, vector<256x256xf32>
    %c255_i32_7 = arith.constant 255 : i32
    %28 = tpu.dynamic_rotate %22 by %c255_i32_7 dim 1 : vector<256x256xf32>, i32 -> vector<256x256xf32>
    %cst_8 = arith.constant 0.000000e+00 : f32
    %29 = vector.shape_cast %9 : vector<1x256xi1> to vector<1x256xi1>
    %30 = vector.broadcast %29 : vector<1x256xi1> to vector<256x256xi1>
    %31 = vector.broadcast %cst_8 : f32 to vector<256x256xf32>
    %32 = arith.select %30, %28, %31 : vector<256x256xi1>, vector<256x256xf32>
    %33 = arith.maximumf %27, %32 : vector<256x256xf32>
    %34 = arith.maximumf %22, %33 : vector<256x256xf32>
    %c1_i32_9 = arith.constant 1 : i32
    %35 = tpu.dynamic_rotate %34 by %c1_i32_9 dim 0 : vector<256x256xf32>, i32 -> vector<256x256xf32>
    %cst_10 = arith.constant 1.000000e+00 : f32
    %36 = vector.shape_cast %3 : vector<256x1xi1> to vector<256x1xi1>
    %37 = vector.broadcast %36 : vector<256x1xi1> to vector<256x256xi1>
    %38 = vector.broadcast %cst_10 : f32 to vector<256x256xf32>
    %39 = arith.select %37, %35, %38 : vector<256x256xi1>, vector<256x256xf32>
    %c255_i32_11 = arith.constant 255 : i32
    %40 = tpu.dynamic_rotate %34 by %c255_i32_11 dim 0 : vector<256x256xf32>, i32 -> vector<256x256xf32>
    %cst_12 = arith.constant 1.000000e+00 : f32
    %41 = vector.shape_cast %5 : vector<256x1xi1> to vector<256x1xi1>
    %42 = vector.broadcast %41 : vector<256x1xi1> to vector<256x256xi1>
    %43 = vector.broadcast %cst_12 : f32 to vector<256x256xf32>
    %44 = arith.select %42, %40, %43 : vector<256x256xi1>, vector<256x256xf32>
    %45 = arith.minimumf %39, %44 : vector<256x256xf32>
    %46 = arith.minimumf %34, %45 : vector<256x256xf32>
    %c1_i32_13 = arith.constant 1 : i32
    %47 = tpu.dynamic_rotate %46 by %c1_i32_13 dim 1 : vector<256x256xf32>, i32 -> vector<256x256xf32>
    %cst_14 = arith.constant 1.000000e+00 : f32
    %48 = vector.shape_cast %7 : vector<1x256xi1> to vector<1x256xi1>
    %49 = vector.broadcast %48 : vector<1x256xi1> to vector<256x256xi1>
    %50 = vector.broadcast %cst_14 : f32 to vector<256x256xf32>
    %51 = arith.select %49, %47, %50 : vector<256x256xi1>, vector<256x256xf32>
    %c255_i32_15 = arith.constant 255 : i32
    %52 = tpu.dynamic_rotate %46 by %c255_i32_15 dim 1 : vector<256x256xf32>, i32 -> vector<256x256xf32>
    %cst_16 = arith.constant 1.000000e+00 : f32
    %53 = vector.shape_cast %9 : vector<1x256xi1> to vector<1x256xi1>
    %54 = vector.broadcast %53 : vector<1x256xi1> to vector<256x256xi1>
    %55 = vector.broadcast %cst_16 : f32 to vector<256x256xf32>
    %56 = arith.select %54, %52, %55 : vector<256x256xi1>, vector<256x256xf32>
    %57 = arith.minimumf %51, %56 : vector<256x256xf32>
    %58 = arith.minimumf %46, %57 : vector<256x256xf32>
    %c0_17 = arith.constant 0 : index
    %c0_18 = arith.constant 0 : index
    %59 = vector.load %arg2[%c0_17, %c0_18] : memref<256x256xf32, #tpu.memory_space<vmem>>, vector<256x256xf32>
    tpu.vector_store %arg2[%c0_17, %c0_18], %58 {strides = array<i32>} : memref<256x256xf32, #tpu.memory_space<vmem>>, vector<256x256xf32>,
    return
  }
  func.func @transform_0(%arg0: i32) -> (i32, i32) {
    %c0_i32 = arith.constant 0 : i32
    %c0_i32_0 = arith.constant 0 : i32
    %c0_i32_1 = arith.constant 0 : i32
    return %c0_i32, %c0_i32_0 : i32, i32
  }
  func.func @transform_1(%arg0: i32) -> (i32, i32) {
    %c0_i32 = arith.constant 0 : i32
    %c0_i32_0 = arith.constant 0 : i32
    %c0_i32_1 = arith.constant 0 : i32
    return %c0_i32, %c0_i32_0 : i32, i32
  }
}

</mosaic_0001>

<llo_original>
// kernel: tpu_custom_call.1
$region0: #{tpu_custom_call.1}
  #allocation0 [shape = 'u32[]', space=smem, size = 0x4, offset = 0x4, fixed_abs, tag = 'smem constant byte address 0x4 - core index']
  #allocation1 [shape = 'u32[144,128]{1,0:T(1,128)}', space=vmem, size = 0x12000, scoped, tag = 'internal scratch']
  %s0 = inlined_call_operand.hbm [shape: f32[256,256], index: 0, kind: input, shape index: {}]
  %s1 = inlined_call_operand.hbm [shape: f32[256,256], index: 1, kind: output, shape index: {}]
  %s2 = sld [smem:[#allocation0]]
  $region18: #{tpu_custom_call.1} parent=0
    _
  %s4 = ssub.s32 1, %s2
  %s5 = scalar_select 0, %s4, %s2
  $region1: #{tpu_custom_call.1} parent=0
    #allocation2 [shape = 'u8[262144]{0}', space=vmem, size = 0x40000, scoped, tag = 'input window, operand 0, single buffered']
    #allocation3 [shape = 's32[1]{0}', space=sflag, size = 0x4, scoped, tag = 'scoped memory for tpu_custom_call.1']
    #allocation4 [shape = 's32[1]{0}', space=sflag, size = 0x4, scoped, tag = 'scoped memory for tpu_custom_call.1']
    #allocation5 [shape = 'u8[262144]{0}', space=vmem, size = 0x40000, scoped, tag = 'output window, operand 0, single buffered']
    %6 = vsyncpa [#allocation3], 0
    %7 = vsyncpa [#allocation4], 0
    // Predicated region
    $region2: #{tpu_custom_call.1} parent=1 // pred_check
      _
    $region3: #{tpu_custom_call.1} parent=1 // pred_check_branch
      %9 = sbr.rel (0) target = $region5
    $region4: #{tpu_custom_call.1} parent=1 // pred_region
      %s11 = ssub.s32 8192, 8192
      %12 = vsyncadd [#allocation3], %s11
      %s13 = sshll.u32 [#allocation2], 4
      %s14 = int_to_ptr.vmem [resolvable:$true] %s13
      %19 = dma.hbm_to_vmem [thread:$0]  %s0, 8192, %s14, [#allocation3], 256, 256, 16
    $region5: #{tpu_custom_call.1} parent=1 // pred_fallthru
      _
    // Predicated region
    $region6: #{tpu_custom_call.1} parent=1 // pred_check
      _
    $region7: #{tpu_custom_call.1} parent=1 // pred_check_branch
      %21 = sbr.rel (0) target = $region9
    $region8: #{tpu_custom_call.1} parent=1 // pred_region
      %22 = dma.done [#allocation3], 8192
    $region9: #{tpu_custom_call.1} parent=1 // pred_fallthru
      _
    %v23 = vlaneseq
    %v24 = vshrl.u32 %v23, 7
    %v25 = vadd.s32 %v24, 8
    %v26 = vadd.s32 %v24, 16
    %v27 = vadd.s32 %v24, 24
    %v28 = vadd.s32 %v24, 32
    %v29 = vadd.s32 %v24, 40
    %v30 = vadd.s32 %v24, 48
    %v31 = vadd.s32 %v24, 56
    %v32 = vadd.s32 %v24, 64
    %v33 = vadd.s32 %v24, 72
    %v34 = vadd.s32 %v24, 80
    %v35 = vadd.s32 %v24, 88
    %v36 = vadd.s32 %v24, 96
    %v37 = vadd.s32 %v24, 104
    %v38 = vadd.s32 %v24, 112
    %v39 = vadd.s32 %v24, 120
    %v40 = vadd.s32 %v24, 128
    %v41 = vadd.s32 %v24, 136
    %v42 = vadd.s32 %v24, 144
    %v43 = vadd.s32 %v24, 152
    %v44 = vadd.s32 %v24, 160
    %v45 = vadd.s32 %v24, 168
    %v46 = vadd.s32 %v24, 176
    %v47 = vadd.s32 %v24, 184
    %v48 = vadd.s32 %v24, 192
    %v49 = vadd.s32 %v24, 200
    %v50 = vadd.s32 %v24, 208
    %v51 = vadd.s32 %v24, 216
    %v52 = vadd.s32 %v24, 224
    %v53 = vadd.s32 %v24, 232
    %v54 = vadd.s32 %v24, 240
    %v55 = vadd.s32 %v24, 248
    %v56 = vlaneseq
    %v57 = vand.u32 %v56, 127
    %v58 = vadd.s32 %v57, 128
    %vm59 = vcmp.gt.s32.totalorder %v24, 0
    %vm60 = vcmp.gt.s32.totalorder %v25, 0
    %vm61 = vcmp.gt.s32.totalorder %v26, 0
    %vm62 = vcmp.gt.s32.totalorder %v27, 0
    %vm63 = vcmp.gt.s32.totalorder %v28, 0
    %vm64 = vcmp.gt.s32.totalorder %v29, 0
    %vm65 = vcmp.gt.s32.totalorder %v30, 0
    %vm66 = vcmp.gt.s32.totalorder %v31, 0
    %vm67 = vcmp.gt.s32.totalorder %v32, 0
    %vm68 = vcmp.gt.s32.totalorder %v33, 0
    %vm69 = vcmp.gt.s32.totalorder %v34, 0
    %vm70 = vcmp.gt.s32.totalorder %v35, 0
    %vm71 = vcmp.gt.s32.totalorder %v36, 0
    %vm72 = vcmp.gt.s32.totalorder %v37, 0
    %vm73 = vcmp.gt.s32.totalorder %v38, 0
    %vm74 = vcmp.gt.s32.totalorder %v39, 0
    %vm75 = vcmp.gt.s32.totalorder %v40, 0
    %vm76 = vcmp.gt.s32.totalorder %v41, 0
    %vm77 = vcmp.gt.s32.totalorder %v42, 0
    %vm78 = vcmp.gt.s32.totalorder %v43, 0
    %vm79 = vcmp.gt.s32.totalorder %v44, 0
    %vm80 = vcmp.gt.s32.totalorder %v45, 0
    %vm81 = vcmp.gt.s32.totalorder %v46, 0
    %vm82 = vcmp.gt.s32.totalorder %v47, 0
    %vm83 = vcmp.gt.s32.totalorder %v48, 0
    %vm84 = vcmp.gt.s32.totalorder %v49, 0
    %vm85 = vcmp.gt.s32.totalorder %v50, 0
    %vm86 = vcmp.gt.s32.totalorder %v51, 0
    %vm87 = vcmp.gt.s32.totalorder %v52, 0
    %vm88 = vcmp.gt.s32.totalorder %v53, 0
    %vm89 = vcmp.gt.s32.totalorder %v54, 0
    %vm90 = vcmp.gt.s32.totalorder %v55, 0
    %vm91 = vcmp.lt.s32.totalorder %v24, 255
    %vm92 = vcmp.lt.s32.totalorder %v25, 255
    %vm93 = vcmp.lt.s32.totalorder %v26, 255
    %vm94 = vcmp.lt.s32.totalorder %v27, 255
    %vm95 = vcmp.lt.s32.totalorder %v28, 255
    %vm96 = vcmp.lt.s32.totalorder %v29, 255
    %vm97 = vcmp.lt.s32.totalorder %v30, 255
    %vm98 = vcmp.lt.s32.totalorder %v31, 255
    %vm99 = vcmp.lt.s32.totalorder %v32, 255
    %vm100 = vcmp.lt.s32.totalorder %v33, 255
    %vm101 = vcmp.lt.s32.totalorder %v34, 255
    %vm102 = vcmp.lt.s32.totalorder %v35, 255
    %vm103 = vcmp.lt.s32.totalorder %v36, 255
    %vm104 = vcmp.lt.s32.totalorder %v37, 255
    %vm105 = vcmp.lt.s32.totalorder %v38, 255
    %vm106 = vcmp.lt.s32.totalorder %v39, 255
    %vm107 = vcmp.lt.s32.totalorder %v40, 255
    %vm108 = vcmp.lt.s32.totalorder %v41, 255
    %vm109 = vcmp.lt.s32.totalorder %v42, 255
    %vm110 = vcmp.lt.s32.totalorder %v43, 255
    %vm111 = vcmp.lt.s32.totalorder %v44, 255
    %vm112 = vcmp.lt.s32.totalorder %v45, 255
    %vm113 = vcmp.lt.s32.totalorder %v46, 255
    %vm114 = vcmp.lt.s32.totalorder %v47, 255
    %vm115 = vcmp.lt.s32.totalorder %v48, 255
    %vm116 = vcmp.lt.s32.totalorder %v49, 255
    %vm117 = vcmp.lt.s32.totalorder %v50, 255
    %vm118 = vcmp.lt.s32.totalorder %v51, 255
    %vm119 = vcmp.lt.s32.totalorder %v52, 255
    %vm120 = vcmp.lt.s32.totalorder %v53, 255
    %vm121 = vcmp.lt.s32.totalorder %v54, 255
    %vm122 = vcmp.lt.s32.totalorder %v55, 255
    %vm123 = vcmp.gt.s32.totalorder %v57, 0
    %vm124 = vcmp.gt.s32.totalorder %v58, 0
    %vm125 = vcmp.lt.s32.totalorder %v57, 255
    %vm126 = vcmp.lt.s32.totalorder %v58, 255
    %v127 = vld [vmem:[#allocation2] sm:$0xff]
    %v128 = vld [vmem:[#allocation2 + $0x8] sm:$0xff]
    %v129 = vld [vmem:[#allocation2 + $0x10] sm:$0xff]
    %v130 = vld [vmem:[#allocation2 + $0x18] sm:$0xff]
    %v131 = vld [vmem:[#allocation2 + $0x20] sm:$0xff]
    %v132 = vld [vmem:[#allocation2 + $0x28] sm:$0xff]
    %v133 = vld [vmem:[#allocation2 + $0x30] sm:$0xff]
    %v134 = vld [vmem:[#allocation2 + $0x38] sm:$0xff]
    %v135 = vld [vmem:[#allocation2 + $0x40] sm:$0xff]
    %v136 = vld [vmem:[#allocation2 + $0x48] sm:$0xff]
    %v137 = vld [vmem:[#allocation2 + $0x50] sm:$0xff]
    %v138 = vld [vmem:[#allocation2 + $0x58] sm:$0xff]
    %v139 = vld [vmem:[#allocation2 + $0x60] sm:$0xff]
    %v140 = vld [vmem:[#allocation2 + $0x68] sm:$0xff]
    %v141 = vld [vmem:[#allocation2 + $0x70] sm:$0xff]
    %v142 = vld [vmem:[#allocation2 + $0x78] sm:$0xff]
    %v143 = vld [vmem:[#allocation2 + $0x80] sm:$0xff]
    %v144 = vld [vmem:[#allocation2 + $0x88] sm:$0xff]
    %v145 = vld [vmem:[#allocation2 + $0x90] sm:$0xff]
    %v146 = vld [vmem:[#allocation2 + $0x98] sm:$0xff]
    %v147 = vld [vmem:[#allocation2 + $0xa0] sm:$0xff]
    %v148 = vld [vmem:[#allocation2 + $0xa8] sm:$0xff]
    %v149 = vld [vmem:[#allocation2 + $0xb0] sm:$0xff]
    %v150 = vld [vmem:[#allocation2 + $0xb8] sm:$0xff]
    %v151 = vld [vmem:[#allocation2 + $0xc0] sm:$0xff]
    %v152 = vld [vmem:[#allocation2 + $0xc8] sm:$0xff]
    %v153 = vld [vmem:[#allocation2 + $0xd0] sm:$0xff]
    %v154 = vld [vmem:[#allocation2 + $0xd8] sm:$0xff]
    %v155 = vld [vmem:[#allocation2 + $0xe0] sm:$0xff]
    %v156 = vld [vmem:[#allocation2 + $0xe8] sm:$0xff]
    %v157 = vld [vmem:[#allocation2 + $0xf0] sm:$0xff]
    %v158 = vld [vmem:[#allocation2 + $0xf8] sm:$0xff]
    %v159 = vld [vmem:[#allocation2 + $0x100] sm:$0xff]
    %v160 = vld [vmem:[#allocation2 + $0x108] sm:$0xff]
    %v161 = vld [vmem:[#allocation2 + $0x110] sm:$0xff]
    %v162 = vld [vmem:[#allocation2 + $0x118] sm:$0xff]
    %v163 = vld [vmem:[#allocation2 + $0x120] sm:$0xff]
    %v164 = vld [vmem:[#allocation2 + $0x128] sm:$0xff]
    %v165 = vld [vmem:[#allocation2 + $0x130] sm:$0xff]
    %v166 = vld [vmem:[#allocation2 + $0x138] sm:$0xff]
    %v167 = vld [vmem:[#allocation2 + $0x140] sm:$0xff]
    %v168 = vld [vmem:[#allocation2 + $0x148] sm:$0xff]
    %v169 = vld [vmem:[#allocation2 + $0x150] sm:$0xff]
    %v170 = vld [vmem:[#allocation2 + $0x158] sm:$0xff]
    %v171 = vld [vmem:[#allocation2 + $0x160] sm:$0xff]
    %v172 = vld [vmem:[#allocation2 + $0x168] sm:$0xff]
    %v173 = vld [vmem:[#allocation2 + $0x170] sm:$0xff]
    %v174 = vld [vmem:[#allocation2 + $0x178] sm:$0xff]
    %v175 = vld [vmem:[#allocation2 + $0x180] sm:$0xff]
    %v176 = vld [vmem:[#allocation2 + $0x188] sm:$0xff]
    %v177 = vld [vmem:[#allocation2 + $0x190] sm:$0xff]
    %v178 = vld [vmem:[#allocation2 + $0x198] sm:$0xff]
    %v179 = vld [vmem:[#allocation2 + $0x1a0] sm:$0xff]
    %v180 = vld [vmem:[#allocation2 + $0x1a8] sm:$0xff]
    %v181 = vld [vmem:[#allocation2 + $0x1b0] sm:$0xff]
    %v182 = vld [vmem:[#allocation2 + $0x1b8] sm:$0xff]
    %v183 = vld [vmem:[#allocation2 + $0x1c0] sm:$0xff]
    %v184 = vld [vmem:[#allocation2 + $0x1c8] sm:$0xff]
    %v185 = vld [vmem:[#allocation2 + $0x1d0] sm:$0xff]
    %v186 = vld [vmem:[#allocation2 + $0x1d8] sm:$0xff]
    %v187 = vld [vmem:[#allocation2 + $0x1e0] sm:$0xff]
    %v188 = vld [vmem:[#allocation2 + $0x1e8] sm:$0xff]
    %v189 = vld [vmem:[#allocation2 + $0x1f0] sm:$0xff]
    %v190 = vld [vmem:[#allocation2 + $0x1f8] sm:$0xff]
    %v191 = vrot.slane %v127, 7
    %v192 = vrot.slane %v128, 7
    %v193 = vrot.slane %v129, 7
    %v194 = vrot.slane %v130, 7
    %v195 = vrot.slane %v131, 7
    %v196 = vrot.slane %v132, 7
    %v197 = vrot.slane %v133, 7
    %v198 = vrot.slane %v134, 7
    %v199 = vrot.slane %v135, 7
    %v200 = vrot.slane %v136, 7
    %v201 = vrot.slane %v137, 7
    %v202 = vrot.slane %v138, 7
    %v203 = vrot.slane %v139, 7
    %v204 = vrot.slane %v140, 7
    %v205 = vrot.slane %v141, 7
    %v206 = vrot.slane %v142, 7
    %v207 = vrot.slane %v143, 7
    %v208 = vrot.slane %v144, 7
    %v209 = vrot.slane %v145, 7
    %v210 = vrot.slane %v146, 7
    %v211 = vrot.slane %v147, 7
    %v212 = vrot.slane %v148, 7
    %v213 = vrot.slane %v149, 7
    %v214 = vrot.slane %v150, 7
    %v215 = vrot.slane %v151, 7
    %v216 = vrot.slane %v152, 7
    %v217 = vrot.slane %v153, 7
    %v218 = vrot.slane %v154, 7
    %v219 = vrot.slane %v155, 7
    %v220 = vrot.slane %v156, 7
    %v221 = vrot.slane %v157, 7
    %v222 = vrot.slane %v158, 7
    %v223 = vrot.slane %v159, 7
    %v224 = vrot.slane %v160, 7
    %v225 = vrot.slane %v161, 7
    %v226 = vrot.slane %v162, 7
    %v227 = vrot.slane %v163, 7
    %v228 = vrot.slane %v164, 7
    %v229 = vrot.slane %v165, 7
    %v230 = vrot.slane %v166, 7
    %v231 = vrot.slane %v167, 7
    %v232 = vrot.slane %v168, 7
    %v233 = vrot.slane %v169, 7
    %v234 = vrot.slane %v170, 7
    %v235 = vrot.slane %v171, 7
    %v236 = vrot.slane %v172, 7
    %v237 = vrot.slane %v173, 7
    %v238 = vrot.slane %v174, 7
    %v239 = vrot.slane %v175, 7
    %v240 = vrot.slane %v176, 7
    %v241 = vrot.slane %v177, 7
    %v242 = vrot.slane %v178, 7
    %v243 = vrot.slane %v179, 7
    %v244 = vrot.slane %v180, 7
    %v245 = vrot.slane %v181, 7
    %v246 = vrot.slane %v182, 7
    %v247 = vrot.slane %v183, 7
    %v248 = vrot.slane %v184, 7
    %v249 = vrot.slane %v185, 7
    %v250 = vrot.slane %v186, 7
    %v251 = vrot.slane %v187, 7
    %v252 = vrot.slane %v188, 7
    %v253 = vrot.slane %v189, 7
    %v254 = vrot.slane %v190, 7
    %vm255 = vcmp.lt.s32.totalorder %v24, 1
    %v256 = vsel %vm255, %v251, %v253
    %v257 = vsel %vm255, %v252, %v254
    %v258 = vsel %vm255, %v249, %v251
    %v259 = vsel %vm255, %v250, %v252
    %v260 = vsel %vm255, %v247, %v249
    %v261 = vsel %vm255, %v248, %v250
    %v262 = vsel %vm255, %v245, %v247
    %v263 = vsel %vm255, %v246, %v248
    %v264 = vsel %vm255, %v243, %v245
    %v265 = vsel %vm255, %v244, %v246
    %v266 = vsel %vm255, %v241, %v243
    %v267 = vsel %vm255, %v242, %v244
    %v268 = vsel %vm255, %v239, %v241
    %v269 = vsel %vm255, %v240, %v242
    %v270 = vsel %vm255, %v237, %v239
    %v271 = vsel %vm255, %v238, %v240
    %v272 = vsel %vm255, %v235, %v237
    %v273 = vsel %vm255, %v236, %v238
    %v274 = vsel %vm255, %v233, %v235
    %v275 = vsel %vm255, %v234, %v236
    %v276 = vsel %vm255, %v231, %v233
    %v277 = vsel %vm255, %v232, %v234
    %v278 = vsel %vm255, %v229, %v231
    %v279 = vsel %vm255, %v230, %v232
    %v280 = vsel %vm255, %v227, %v229
    %v281 = vsel %vm255, %v228, %v230
    %v282 = vsel %vm255, %v225, %v227
    %v283 = vsel %vm255, %v226, %v228
    %v284 = vsel %vm255, %v223, %v225
    %v285 = vsel %vm255, %v224, %v226
    %v286 = vsel %vm255, %v221, %v223
    %v287 = vsel %vm255, %v222, %v224
    %v288 = vsel %vm255, %v219, %v221
    %v289 = vsel %vm255, %v220, %v222
    %v290 = vsel %vm255, %v217, %v219
    %v291 = vsel %vm255, %v218, %v220
    %v292 = vsel %vm255, %v215, %v217
    %v293 = vsel %vm255, %v216, %v218
    %v294 = vsel %vm255, %v213, %v215
    %v295 = vsel %vm255, %v214, %v216
    %v296 = vsel %vm255, %v211, %v213
    %v297 = vsel %vm255, %v212, %v214
    %v298 = vsel %vm255, %v209, %v211
    %v299 = vsel %vm255, %v210, %v212
    %v300 = vsel %vm255, %v207, %v209
    %v301 = vsel %vm255, %v208, %v210
    %v302 = vsel %vm255, %v205, %v207
    %v303 = vsel %vm255, %v206, %v208
    %v304 = vsel %vm255, %v203, %v205
    %v305 = vsel %vm255, %v204, %v206
    %v306 = vsel %vm255, %v201, %v203
    %v307 = vsel %vm255, %v202, %v204
    %v308 = vsel %vm255, %v199, %v201
    %v309 = vsel %vm255, %v200, %v202
    %v310 = vsel %vm255, %v197, %v199
    %v311 = vsel %vm255, %v198, %v200
    %v312 = vsel %vm255, %v195, %v197
    %v313 = vsel %vm255, %v196, %v198
    %v314 = vsel %vm255, %v193, %v195
    %v315 = vsel %vm255, %v194, %v196
    %v316 = vsel %vm255, %v191, %v193
    %v317 = vsel %vm255, %v192, %v194
    %v318 = vsel %vm255, %v253, %v191
    %v319 = vsel %vm255, %v254, %v192
    %v320 = vsel %vm59, 1, 0
    %v321 = vsel %vm60, 1, 0
    %v322 = vsel %vm61, 1, 0
    %v323 = vsel %vm62, 1, 0
    %v324 = vsel %vm63, 1, 0
    %v325 = vsel %vm64, 1, 0
    %v326 = vsel %vm65, 1, 0
    %v327 = vsel %vm66, 1, 0
    %v328 = vsel %vm67, 1, 0
    %v329 = vsel %vm68, 1, 0
    %v330 = vsel %vm69, 1, 0
    %v331 = vsel %vm70, 1, 0
    %v332 = vsel %vm71, 1, 0
    %v333 = vsel %vm72, 1, 0
    %v334 = vsel %vm73, 1, 0
    %v335 = vsel %vm74, 1, 0
    %v336 = vsel %vm75, 1, 0
    %v337 = vsel %vm76, 1, 0
    %v338 = vsel %vm77, 1, 0
    %v339 = vsel %vm78, 1, 0
    %v340 = vsel %vm79, 1, 0
    %v341 = vsel %vm80, 1, 0
    %v342 = vsel %vm81, 1, 0
    %v343 = vsel %vm82, 1, 0
    %v344 = vsel %vm83, 1, 0
    %v345 = vsel %vm84, 1, 0
    %v346 = vsel %vm85, 1, 0
    %v347 = vsel %vm86, 1, 0
    %v348 = vsel %vm87, 1, 0
    %v349 = vsel %vm88, 1, 0
    %v350 = vsel %vm89, 1, 0
    %v351 = vsel %vm90, 1, 0
    %vm352 = vcmp.eq.s32.totalorder %v320, 1
    %vm353 = vcmp.eq.s32.totalorder %v321, 1
    %vm354 = vcmp.eq.s32.totalorder %v322, 1
    %vm355 = vcmp.eq.s32.totalorder %v323, 1
    %vm356 = vcmp.eq.s32.totalorder %v324, 1
    %vm357 = vcmp.eq.s32.totalorder %v325, 1
    %vm358 = vcmp.eq.s32.totalorder %v326, 1
    %vm359 = vcmp.eq.s32.totalorder %v327, 1
    %vm360 = vcmp.eq.s32.totalorder %v328, 1
    %vm361 = vcmp.eq.s32.totalorder %v329, 1
    %vm362 = vcmp.eq.s32.totalorder %v330, 1
    %vm363 = vcmp.eq.s32.totalorder %v331, 1
    %vm364 = vcmp.eq.s32.totalorder %v332, 1
    %vm365 = vcmp.eq.s32.totalorder %v333, 1
    %vm366 = vcmp.eq.s32.totalorder %v334, 1
    %vm367 = vcmp.eq.s32.totalorder %v335, 1
    %vm368 = vcmp.eq.s32.totalorder %v336, 1
    %vm369 = vcmp.eq.s32.totalorder %v337, 1
    %vm370 = vcmp.eq.s32.totalorder %v338, 1
    %vm371 = vcmp.eq.s32.totalorder %v339, 1
    %vm372 = vcmp.eq.s32.totalorder %v340, 1
    %vm373 = vcmp.eq.s32.totalorder %v341, 1
    %vm374 = vcmp.eq.s32.totalorder %v342, 1
    %vm375 = vcmp.eq.s32.totalorder %v343, 1
    %vm376 = vcmp.eq.s32.totalorder %v344, 1
    %vm377 = vcmp.eq.s32.totalorder %v345, 1
    %vm378 = vcmp.eq.s32.totalorder %v346, 1
    %vm379 = vcmp.eq.s32.totalorder %v347, 1
    %vm380 = vcmp.eq.s32.totalorder %v348, 1
    %vm381 = vcmp.eq.s32.totalorder %v349, 1
    %vm382 = vcmp.eq.s32.totalorder %v350, 1
    %vm383 = vcmp.eq.s32.totalorder %v351, 1
    %v384 = vsel %vm352, %v318, 0.0
    %v385 = vsel %vm352, %v319, 0.0
    %v386 = vsel %vm353, %v316, 0.0
    %v387 = vsel %vm353, %v317, 0.0
    %v388 = vsel %vm354, %v314, 0.0
    %v389 = vsel %vm354, %v315, 0.0
    %v390 = vsel %vm355, %v312, 0.0
    %v391 = vsel %vm355, %v313, 0.0
    %v392 = vsel %vm356, %v310, 0.0
    %v393 = vsel %vm356, %v311, 0.0
    %v394 = vsel %vm357, %v308, 0.0
    %v395 = vsel %vm357, %v309, 0.0
    %v396 = vsel %vm358, %v306, 0.0
    %v397 = vsel %vm358, %v307, 0.0
    %v398 = vsel %vm359, %v304, 0.0
    %v399 = vsel %vm359, %v305, 0.0
    %v400 = vsel %vm360, %v302, 0.0
    %v401 = vsel %vm360, %v303, 0.0
    %v402 = vsel %vm361, %v300, 0.0
    %v403 = vsel %vm361, %v301, 0.0
    %v404 = vsel %vm362, %v298, 0.0
    %v405 = vsel %vm362, %v299, 0.0
    %v406 = vsel %vm363, %v296, 0.0
    %v407 = vsel %vm363, %v297, 0.0
    %v408 = vsel %vm364, %v294, 0.0
    %v409 = vsel %vm364, %v295, 0.0
    %v410 = vsel %vm365, %v292, 0.0
    %v411 = vsel %vm365, %v293, 0.0
    %v412 = vsel %vm366, %v290, 0.0
    %v413 = vsel %vm366, %v291, 0.0
    %v414 = vsel %vm367, %v288, 0.0
    %v415 = vsel %vm367, %v289, 0.0
    %v416 = vsel %vm368, %v286, 0.0
    %v417 = vsel %vm368, %v287, 0.0
    %v418 = vsel %vm369, %v284, 0.0
    %v419 = vsel %vm369, %v285, 0.0
    %v420 = vsel %vm370, %v282, 0.0
    %v421 = vsel %vm370, %v283, 0.0
    %v422 = vsel %vm371, %v280, 0.0
    %v423 = vsel %vm371, %v281, 0.0
    %v424 = vsel %vm372, %v278, 0.0
    %v425 = vsel %vm372, %v279, 0.0
    %v426 = vsel %vm373, %v276, 0.0
    %v427 = vsel %vm373, %v277, 0.0
    %v428 = vsel %vm374, %v274, 0.0
    %v429 = vsel %vm374, %v275, 0.0
    %v430 = vsel %vm375, %v272, 0.0
    %v431 = vsel %vm375, %v273, 0.0
    %v432 = vsel %vm376, %v270, 0.0
    %v433 = vsel %vm376, %v271, 0.0
    %v434 = vsel %vm377, %v268, 0.0
    %v435 = vsel %vm377, %v269, 0.0
    %v436 = vsel %vm378, %v266, 0.0
    %v437 = vsel %vm378, %v267, 0.0
    %v438 = vsel %vm379, %v264, 0.0
    %v439 = vsel %vm379, %v265, 0.0
    %v440 = vsel %vm380, %v262, 0.0
    %v441 = vsel %vm380, %v263, 0.0
    %v442 = vsel %vm381, %v260, 0.0
    %v443 = vsel %vm381, %v261, 0.0
    %v444 = vsel %vm382, %v258, 0.0
    %v445 = vsel %vm382, %v259, 0.0
    %v446 = vsel %vm383, %v256, 0.0
    %v447 = vsel %vm383, %v257, 0.0
    %v448 = vrot.slane %v127, 1
    %v449 = vrot.slane %v128, 1
    %v450 = vrot.slane %v129, 1
    %v451 = vrot.slane %v130, 1
    %v452 = vrot.slane %v131, 1
    %v453 = vrot.slane %v132, 1
    %v454 = vrot.slane %v133, 1
    %v455 = vrot.slane %v134, 1
    %v456 = vrot.slane %v135, 1
    %v457 = vrot.slane %v136, 1
    %v458 = vrot.slane %v137, 1
    %v459 = vrot.slane %v138, 1
    %v460 = vrot.slane %v139, 1
    %v461 = vrot.slane %v140, 1
    %v462 = vrot.slane %v141, 1
    %v463 = vrot.slane %v142, 1
    %v464 = vrot.slane %v143, 1
    %v465 = vrot.slane %v144, 1
    %v466 = vrot.slane %v145, 1
    %v467 = vrot.slane %v146, 1
    %v468 = vrot.slane %v147, 1
    %v469 = vrot.slane %v148, 1
    %v470 = vrot.slane %v149, 1
    %v471 = vrot.slane %v150, 1
    %v472 = vrot.slane %v151, 1
    %v473 = vrot.slane %v152, 1
    %v474 = vrot.slane %v153, 1
    %v475 = vrot.slane %v154, 1
    %v476 = vrot.slane %v155, 1
    %v477 = vrot.slane %v156, 1
    %v478 = vrot.slane %v157, 1
    %v479 = vrot.slane %v158, 1
    %v480 = vrot.slane %v159, 1
    %v481 = vrot.slane %v160, 1
    %v482 = vrot.slane %v161, 1
    %v483 = vrot.slane %v162, 1
    %v484 = vrot.slane %v163, 1
    %v485 = vrot.slane %v164, 1
    %v486 = vrot.slane %v165, 1
    %v487 = vrot.slane %v166, 1
    %v488 = vrot.slane %v167, 1
    %v489 = vrot.slane %v168, 1
    %v490 = vrot.slane %v169, 1
    %v491 = vrot.slane %v170, 1
    %v492 = vrot.slane %v171, 1
    %v493 = vrot.slane %v172, 1
    %v494 = vrot.slane %v173, 1
    %v495 = vrot.slane %v174, 1
    %v496 = vrot.slane %v175, 1
    %v497 = vrot.slane %v176, 1
    %v498 = vrot.slane %v177, 1
    %v499 = vrot.slane %v178, 1
    %v500 = vrot.slane %v179, 1
    %v501 = vrot.slane %v180, 1
    %v502 = vrot.slane %v181, 1
    %v503 = vrot.slane %v182, 1
    %v504 = vrot.slane %v183, 1
    %v505 = vrot.slane %v184, 1
    %v506 = vrot.slane %v185, 1
    %v507 = vrot.slane %v186, 1
    %v508 = vrot.slane %v187, 1
    %v509 = vrot.slane %v188, 1
    %v510 = vrot.slane %v189, 1
    %v511 = vrot.slane %v190, 1
    %vm512 = vcmp.lt.s32.totalorder %v24, 7
    %v513 = vsel %vm512, %v508, %v510
    %v514 = vsel %vm512, %v509, %v511
    %v515 = vsel %vm512, %v506, %v508
    %v516 = vsel %vm512, %v507, %v509
    %v517 = vsel %vm512, %v504, %v506
    %v518 = vsel %vm512, %v505, %v507
    %v519 = vsel %vm512, %v502, %v504
    %v520 = vsel %vm512, %v503, %v505
    %v521 = vsel %vm512, %v500, %v502
    %v522 = vsel %vm512, %v501, %v503
    %v523 = vsel %vm512, %v498, %v500
    %v524 = vsel %vm512, %v499, %v501
    %v525 = vsel %vm512, %v496, %v498
    %v526 = vsel %vm512, %v497, %v499
    %v527 = vsel %vm512, %v494, %v496
    %v528 = vsel %vm512, %v495, %v497
    %v529 = vsel %vm512, %v492, %v494
    %v530 = vsel %vm512, %v493, %v495
    %v531 = vsel %vm512, %v490, %v492
    %v532 = vsel %vm512, %v491, %v493
    %v533 = vsel %vm512, %v488, %v490
    %v534 = vsel %vm512, %v489, %v491
    %v535 = vsel %vm512, %v486, %v488
    %v536 = vsel %vm512, %v487, %v489
    %v537 = vsel %vm512, %v484, %v486
    %v538 = vsel %vm512, %v485, %v487
    %v539 = vsel %vm512, %v482, %v484
    %v540 = vsel %vm512, %v483, %v485
    %v541 = vsel %vm512, %v480, %v482
    %v542 = vsel %vm512, %v481, %v483
    %v543 = vsel %vm512, %v478, %v480
    %v544 = vsel %vm512, %v479, %v481
    %v545 = vsel %vm512, %v476, %v478
    %v546 = vsel %vm512, %v477, %v479
    %v547 = vsel %vm512, %v474, %v476
    %v548 = vsel %vm512, %v475, %v477
    %v549 = vsel %vm512, %v472, %v474
    %v550 = vsel %vm512, %v473, %v475
    %v551 = vsel %vm512, %v470, %v472
    %v552 = vsel %vm512, %v471, %v473
    %v553 = vsel %vm512, %v468, %v470
    %v554 = vsel %vm512, %v469, %v471
    %v555 = vsel %vm512, %v466, %v468
    %v556 = vsel %vm512, %v467, %v469
    %v557 = vsel %vm512, %v464, %v466
    %v558 = vsel %vm512, %v465, %v467
    %v559 = vsel %vm512, %v462, %v464
    %v560 = vsel %vm512, %v463, %v465
    %v561 = vsel %vm512, %v460, %v462
    %v562 = vsel %vm512, %v461, %v463
    %v563 = vsel %vm512, %v458, %v460
    %v564 = vsel %vm512, %v459, %v461
    %v565 = vsel %vm512, %v456, %v458
    %v566 = vsel %vm512, %v457, %v459
    %v567 = vsel %vm512, %v454, %v456
    %v568 = vsel %vm512, %v455, %v457
    %v569 = vsel %vm512, %v452, %v454
    %v570 = vsel %vm512, %v453, %v455
    %v571 = vsel %vm512, %v450, %v452
    %v572 = vsel %vm512, %v451, %v453
    %v573 = vsel %vm512, %v448, %v450
    %v574 = vsel %vm512, %v449, %v451
    %v575 = vsel %vm512, %v510, %v448
    %v576 = vsel %vm512, %v511, %v449
    %v577 = vsel %vm91, 1, 0
    %v578 = vsel %vm92, 1, 0
    %v579 = vsel %vm93, 1, 0
    %v580 = vsel %vm94, 1, 0
    %v581 = vsel %vm95, 1, 0
    %v582 = vsel %vm96, 1, 0
    %v583 = vsel %vm97, 1, 0
    %v584 = vsel %vm98, 1, 0
    %v585 = vsel %vm99, 1, 0
    %v586 = vsel %vm100, 1, 0
    %v587 = vsel %vm101, 1, 0
    %v588 = vsel %vm102, 1, 0
    %v589 = vsel %vm103, 1, 0
    %v590 = vsel %vm104, 1, 0
    %v591 = vsel %vm105, 1, 0
    %v592 = vsel %vm106, 1, 0
    %v593 = vsel %vm107, 1, 0
    %v594 = vsel %vm108, 1, 0
    %v595 = vsel %vm109, 1, 0
    %v596 = vsel %vm110, 1, 0
    %v597 = vsel %vm111, 1, 0
    %v598 = vsel %vm112, 1, 0
    %v599 = vsel %vm113, 1, 0
    %v600 = vsel %vm114, 1, 0
    %v601 = vsel %vm115, 1, 0
    %v602 = vsel %vm116, 1, 0
    %v603 = vsel %vm117, 1, 0
    %v604 = vsel %vm118, 1, 0
    %v605 = vsel %vm119, 1, 0
    %v606 = vsel %vm120, 1, 0
    %v607 = vsel %vm121, 1, 0
    %v608 = vsel %vm122, 1, 0
    %vm609 = vcmp.eq.s32.totalorder %v577, 1
    %vm610 = vcmp.eq.s32.totalorder %v578, 1
    %vm611 = vcmp.eq.s32.totalorder %v579, 1
    %vm612 = vcmp.eq.s32.totalorder %v580, 1
    %vm613 = vcmp.eq.s32.totalorder %v581, 1
    %vm614 = vcmp.eq.s32.totalorder %v582, 1
    %vm615 = vcmp.eq.s32.totalorder %v583, 1
    %vm616 = vcmp.eq.s32.totalorder %v584, 1
    %vm617 = vcmp.eq.s32.totalorder %v585, 1
    %vm618 = vcmp.eq.s32.totalorder %v586, 1
    %vm619 = vcmp.eq.s32.totalorder %v587, 1
    %vm620 = vcmp.eq.s32.totalorder %v588, 1
    %vm621 = vcmp.eq.s32.totalorder %v589, 1
    %vm622 = vcmp.eq.s32.totalorder %v590, 1
    %vm623 = vcmp.eq.s32.totalorder %v591, 1
    %vm624 = vcmp.eq.s32.totalorder %v592, 1
    %vm625 = vcmp.eq.s32.totalorder %v593, 1
    %vm626 = vcmp.eq.s32.totalorder %v594, 1
    %vm627 = vcmp.eq.s32.totalorder %v595, 1
    %vm628 = vcmp.eq.s32.totalorder %v596, 1
    %vm629 = vcmp.eq.s32.totalorder %v597, 1
    %vm630 = vcmp.eq.s32.totalorder %v598, 1
    %vm631 = vcmp.eq.s32.totalorder %v599, 1
    %vm632 = vcmp.eq.s32.totalorder %v600, 1
    %vm633 = vcmp.eq.s32.totalorder %v601, 1
    %vm634 = vcmp.eq.s32.totalorder %v602, 1
    %vm635 = vcmp.eq.s32.totalorder %v603, 1
    %vm636 = vcmp.eq.s32.totalorder %v604, 1
    %vm637 = vcmp.eq.s32.totalorder %v605, 1
    %vm638 = vcmp.eq.s32.totalorder %v606, 1
    %vm639 = vcmp.eq.s32.totalorder %v607, 1
    %vm640 = vcmp.eq.s32.totalorder %v608, 1
    %v641 = vsel %vm609, %v573, 0.0
    %v642 = vsel %vm609, %v574, 0.0
    %v643 = vsel %vm610, %v571, 0.0
    %v644 = vsel %vm610, %v572, 0.0
    %v645 = vsel %vm611, %v569, 0.0
    %v646 = vsel %vm611, %v570, 0.0
    %v647 = vsel %vm612, %v567, 0.0
    %v648 = vsel %vm612, %v568, 0.0
    %v649 = vsel %vm613, %v565, 0.0
    %v650 = vsel %vm613, %v566, 0.0
    %v651 = vsel %vm614, %v563, 0.0
    %v652 = vsel %vm614, %v564, 0.0
    %v653 = vsel %vm615, %v561, 0.0
    %v654 = vsel %vm615, %v562, 0.0
    %v655 = vsel %vm616, %v559, 0.0
    %v656 = vsel %vm616, %v560, 0.0
    %v657 = vsel %vm617, %v557, 0.0
    %v658 = vsel %vm617, %v558, 0.0
    %v659 = vsel %vm618, %v555, 0.0
    %v660 = vsel %vm618, %v556, 0.0
    %v661 = vsel %vm619, %v553, 0.0
    %v662 = vsel %vm619, %v554, 0.0
    %v663 = vsel %vm620, %v551, 0.0
    %v664 = vsel %vm620, %v552, 0.0
    %v665 = vsel %vm621, %v549, 0.0
    %v666 = vsel %vm621, %v550, 0.0
    %v667 = vsel %vm622, %v547, 0.0
    %v668 = vsel %vm622, %v548, 0.0
    %v669 = vsel %vm623, %v545, 0.0
    %v670 = vsel %vm623, %v546, 0.0
    %v671 = vsel %vm624, %v543, 0.0
    %v672 = vsel %vm624, %v544, 0.0
    %v673 = vsel %vm625, %v541, 0.0
    %v674 = vsel %vm625, %v542, 0.0
    %v675 = vsel %vm626, %v539, 0.0
    %v676 = vsel %vm626, %v540, 0.0
    %v677 = vsel %vm627, %v537, 0.0
    %v678 = vsel %vm627, %v538, 0.0
    %v679 = vsel %vm628, %v535, 0.0
    %v680 = vsel %vm628, %v536, 0.0
    %v681 = vsel %vm629, %v533, 0.0
    %v682 = vsel %vm629, %v534, 0.0
    %v683 = vsel %vm630, %v531, 0.0
    %v684 = vsel %vm630, %v532, 0.0
    %v685 = vsel %vm631, %v529, 0.0
    %v686 = vsel %vm631, %v530, 0.0
    %v687 = vsel %vm632, %v527, 0.0
    %v688 = vsel %vm632, %v528, 0.0
    %v689 = vsel %vm633, %v525, 0.0
    %v690 = vsel %vm633, %v526, 0.0
    %v691 = vsel %vm634, %v523, 0.0
    %v692 = vsel %vm634, %v524, 0.0
    %v693 = vsel %vm635, %v521, 0.0
    %v694 = vsel %vm635, %v522, 0.0
    %v695 = vsel %vm636, %v519, 0.0
    %v696 = vsel %vm636, %v520, 0.0
    %v697 = vsel %vm637, %v517, 0.0
    %v698 = vsel %vm637, %v518, 0.0
    %v699 = vsel %vm638, %v515, 0.0
    %v700 = vsel %vm638, %v516, 0.0
    %v701 = vsel %vm639, %v513, 0.0
    %v702 = vsel %vm639, %v514, 0.0
    %v703 = vsel %vm640, %v575, 0.0
    %v704 = vsel %vm640, %v576, 0.0
    %v705 = vmax.f32 %v384, %v641
    %v706 = vmax.f32 %v385, %v642
    %v707 = vmax.f32 %v386, %v643
    %v708 = vmax.f32 %v387, %v644
    %v709 = vmax.f32 %v388, %v645
    %v710 = vmax.f32 %v389, %v646
    %v711 = vmax.f32 %v390, %v647
    %v712 = vmax.f32 %v391, %v648
    %v713 = vmax.f32 %v392, %v649
    %v714 = vmax.f32 %v393, %v650
    %v715 = vmax.f32 %v394, %v651
    %v716 = vmax.f32 %v395, %v652
    %v717 = vmax.f32 %v396, %v653
    %v718 = vmax.f32 %v397, %v654
    %v719 = vmax.f32 %v398, %v655
    %v720 = vmax.f32 %v399, %v656
    %v721 = vmax.f32 %v400, %v657
    %v722 = vmax.f32 %v401, %v658
    %v723 = vmax.f32 %v402, %v659
    %v724 = vmax.f32 %v403, %v660
    %v725 = vmax.f32 %v404, %v661
    %v726 = vmax.f32 %v405, %v662
    %v727 = vmax.f32 %v406, %v663
    %v728 = vmax.f32 %v407, %v664
    %v729 = vmax.f32 %v408, %v665
    %v730 = vmax.f32 %v409, %v666
    %v731 = vmax.f32 %v410, %v667
    %v732 = vmax.f32 %v411, %v668
    %v733 = vmax.f32 %v412, %v669
    %v734 = vmax.f32 %v413, %v670
    %v735 = vmax.f32 %v414, %v671
    %v736 = vmax.f32 %v415, %v672
    %v737 = vmax.f32 %v416, %v673
    %v738 = vmax.f32 %v417, %v674
    %v739 = vmax.f32 %v418, %v675
    %v740 = vmax.f32 %v419, %v676
    %v741 = vmax.f32 %v420, %v677
    %v742 = vmax.f32 %v421, %v678
    %v743 = vmax.f32 %v422, %v679
    %v744 = vmax.f32 %v423, %v680
    %v745 = vmax.f32 %v424, %v681
    %v746 = vmax.f32 %v425, %v682
    %v747 = vmax.f32 %v426, %v683
    %v748 = vmax.f32 %v427, %v684
    %v749 = vmax.f32 %v428, %v685
    %v750 = vmax.f32 %v429, %v686
    %v751 = vmax.f32 %v430, %v687
    %v752 = vmax.f32 %v431, %v688
    %v753 = vmax.f32 %v432, %v689
    %v754 = vmax.f32 %v433, %v690
    %v755 = vmax.f32 %v434, %v691
    %v756 = vmax.f32 %v435, %v692
    %v757 = vmax.f32 %v436, %v693
    %v758 = vmax.f32 %v437, %v694
    %v759 = vmax.f32 %v438, %v695
    %v760 = vmax.f32 %v439, %v696
    %v761 = vmax.f32 %v440, %v697
    %v762 = vmax.f32 %v441, %v698
    %v763 = vmax.f32 %v442, %v699
    %v764 = vmax.f32 %v443, %v700
    %v765 = vmax.f32 %v444, %v701
    %v766 = vmax.f32 %v445, %v702
    %v767 = vmax.f32 %v446, %v703
    %v768 = vmax.f32 %v447, %v704
    %v769 = vmax.f32 %v127, %v705
    %v770 = vmax.f32 %v128, %v706
    %v771 = vmax.f32 %v129, %v707
    %v772 = vmax.f32 %v130, %v708
    %v773 = vmax.f32 %v131, %v709
    %v774 = vmax.f32 %v132, %v710
    %v775 = vmax.f32 %v133, %v711
    %v776 = vmax.f32 %v134, %v712
    %v777 = vmax.f32 %v135, %v713
    %v778 = vmax.f32 %v136, %v714
    %v779 = vmax.f32 %v137, %v715
    %v780 = vmax.f32 %v138, %v716
    %v781 = vmax.f32 %v139, %v717
    %v782 = vmax.f32 %v140, %v718
    %v783 = vmax.f32 %v141, %v719
    %v784 = vmax.f32 %v142, %v720
    %v785 = vmax.f32 %v143, %v721
    %v786 = vmax.f32 %v144, %v722
    %v787 = vmax.f32 %v145, %v723
    %v788 = vmax.f32 %v146, %v724
    %v789 = vmax.f32 %v147, %v725
    %v790 = vmax.f32 %v148, %v726
    %v791 = vmax.f32 %v149, %v727
    %v792 = vmax.f32 %v150, %v728
    %v793 = vmax.f32 %v151, %v729
    %v794 = vmax.f32 %v152, %v730
    %v795 = vmax.f32 %v153, %v731
    %v796 = vmax.f32 %v154, %v732
    %v797 = vmax.f32 %v155, %v733
    %v798 = vmax.f32 %v156, %v734
    %v799 = vmax.f32 %v157, %v735
    %v800 = vmax.f32 %v158, %v736
    %v801 = vmax.f32 %v159, %v737
    %v802 = vmax.f32 %v160, %v738
    %v803 = vmax.f32 %v161, %v739
    %v804 = vmax.f32 %v162, %v740
    %v805 = vmax.f32 %v163, %v741
    %v806 = vmax.f32 %v164, %v742
    %v807 = vmax.f32 %v165, %v743
    %v808 = vmax.f32 %v166, %v744
    %v809 = vmax.f32 %v167, %v745
    %v810 = vmax.f32 %v168, %v746
    %v811 = vmax.f32 %v169, %v747
    %v812 = vmax.f32 %v170, %v748
    %v813 = vmax.f32 %v171, %v749
    %v814 = vmax.f32 %v172, %v750
    %v815 = vmax.f32 %v173, %v751
    %v816 = vmax.f32 %v174, %v752
    %v817 = vmax.f32 %v175, %v753
    %v818 = vmax.f32 %v176, %v754
    %v819 = vmax.f32 %v177, %v755
    %v820 = vmax.f32 %v178, %v756
    %v821 = vmax.f32 %v179, %v757
    %v822 = vmax.f32 %v180, %v758
    %v823 = vmax.f32 %v181, %v759
    %v824 = vmax.f32 %v182, %v760
    %v825 = vmax.f32 %v183, %v761
    %v826 = vmax.f32 %v184, %v762
    %v827 = vmax.f32 %v185, %v763
    %v828 = vmax.f32 %v186, %v764
    %v829 = vmax.f32 %v187, %v765
    %v830 = vmax.f32 %v188, %v766
    %v831 = vmax.f32 %v189, %v767
    %v832 = vmax.f32 %v190, %v768
    %833 = vrot.lane.b32.xlu0 %v769, 1
    %v834 = vpop.permute.xlu0 %833
    %835 = vrot.lane.b32.xlu0 %v771, 1
    %v836 = vpop.permute.xlu0 %835
    %837 = vrot.lane.b32.xlu0 %v773, 1
    %v838 = vpop.permute.xlu0 %837
    %839 = vrot.lane.b32.xlu0 %v775, 1
    %v840 = vpop.permute.xlu0 %839
    %841 = vrot.lane.b32.xlu0 %v777, 1
    %v842 = vpop.permute.xlu0 %841
    %843 = vrot.lane.b32.xlu0 %v779, 1
    %v844 = vpop.permute.xlu0 %843
    %845 = vrot.lane.b32.xlu0 %v781, 1
    %v846 = vpop.permute.xlu0 %845
    %847 = vrot.lane.b32.xlu0 %v783, 1
    %v848 = vpop.permute.xlu0 %847
    %849 = vrot.lane.b32.xlu0 %v785, 1
    %v850 = vpop.permute.xlu0 %849
    %851 = vrot.lane.b32.xlu0 %v787, 1
    %v852 = vpop.permute.xlu0 %851
    %853 = vrot.lane.b32.xlu0 %v789, 1
    %v854 = vpop.permute.xlu0 %853
    %855 = vrot.lane.b32.xlu0 %v791, 1
    %v856 = vpop.permute.xlu0 %855
    %857 = vrot.lane.b32.xlu0 %v793, 1
    %v858 = vpop.permute.xlu0 %857
    %859 = vrot.lane.b32.xlu0 %v795, 1
    %v860 = vpop.permute.xlu0 %859
    %861 = vrot.lane.b32.xlu0 %v797, 1
    %v862 = vpop.permute.xlu0 %861
    %863 = vrot.lane.b32.xlu0 %v799, 1
    %v864 = vpop.permute.xlu0 %863
    %865 = vrot.lane.b32.xlu0 %v801, 1
    %v866 = vpop.permute.xlu0 %865
    %867 = vrot.lane.b32.xlu0 %v803, 1
    %v868 = vpop.permute.xlu0 %867
    %869 = vrot.lane.b32.xlu0 %v805, 1
    %v870 = vpop.permute.xlu0 %869
    %871 = vrot.lane.b32.xlu0 %v807, 1
    %v872 = vpop.permute.xlu0 %871
    %873 = vrot.lane.b32.xlu0 %v809, 1
    %v874 = vpop.permute.xlu0 %873
    %875 = vrot.lane.b32.xlu0 %v811, 1
    %v876 = vpop.permute.xlu0 %875
    %877 = vrot.lane.b32.xlu0 %v813, 1
    %v878 = vpop.permute.xlu0 %877
    %879 = vrot.lane.b32.xlu0 %v815, 1
    %v880 = vpop.permute.xlu0 %879
    %881 = vrot.lane.b32.xlu0 %v817, 1
    %v882 = vpop.permute.xlu0 %881
    %883 = vrot.lane.b32.xlu0 %v819, 1
    %v884 = vpop.permute.xlu0 %883
    %885 = vrot.lane.b32.xlu0 %v821, 1
    %v886 = vpop.permute.xlu0 %885
    %887 = vrot.lane.b32.xlu0 %v823, 1
    %v888 = vpop.permute.xlu0 %887
    %889 = vrot.lane.b32.xlu0 %v825, 1
    %v890 = vpop.permute.xlu0 %889
    %891 = vrot.lane.b32.xlu0 %v827, 1
    %v892 = vpop.permute.xlu0 %891
    %893 = vrot.lane.b32.xlu0 %v829, 1
    %v894 = vpop.permute.xlu0 %893
    %895 = vrot.lane.b32.xlu0 %v831, 1
    %v896 = vpop.permute.xlu0 %895
    %897 = vrot.lane.b32.xlu0 %v770, 1
    %v898 = vpop.permute.xlu0 %897
    %899 = vrot.lane.b32.xlu0 %v772, 1
    %v900 = vpop.permute.xlu0 %899
    %901 = vrot.lane.b32.xlu0 %v774, 1
    %v902 = vpop.permute.xlu0 %901
    %903 = vrot.lane.b32.xlu0 %v776, 1
    %v904 = vpop.permute.xlu0 %903
    %905 = vrot.lane.b32.xlu0 %v778, 1
    %v906 = vpop.permute.xlu0 %905
    %907 = vrot.lane.b32.xlu0 %v780, 1
    %v908 = vpop.permute.xlu0 %907
    %909 = vrot.lane.b32.xlu0 %v782, 1
    %v910 = vpop.permute.xlu0 %909
    %911 = vrot.lane.b32.xlu0 %v784, 1
    %v912 = vpop.permute.xlu0 %911
    %913 = vrot.lane.b32.xlu0 %v786, 1
    %v914 = vpop.permute.xlu0 %913
    %915 = vrot.lane.b32.xlu0 %v788, 1
    %v916 = vpop.permute.xlu0 %915
    %917 = vrot.lane.b32.xlu0 %v790, 1
    %v918 = vpop.permute.xlu0 %917
    %919 = vrot.lane.b32.xlu0 %v792, 1
    %v920 = vpop.permute.xlu0 %919
    %921 = vrot.lane.b32.xlu0 %v794, 1
    %v922 = vpop.permute.xlu0 %921
    %923 = vrot.lane.b32.xlu0 %v796, 1
    %v924 = vpop.permute.xlu0 %923
    %925 = vrot.lane.b32.xlu0 %v798, 1
    %v926 = vpop.permute.xlu0 %925
    %927 = vrot.lane.b32.xlu0 %v800, 1
    %v928 = vpop.permute.xlu0 %927
    %929 = vrot.lane.b32.xlu0 %v802, 1
    %v930 = vpop.permute.xlu0 %929
    %931 = vrot.lane.b32.xlu0 %v804, 1
    %v932 = vpop.permute.xlu0 %931
    %933 = vrot.lane.b32.xlu0 %v806, 1
    %v934 = vpop.permute.xlu0 %933
    %935 = vrot.lane.b32.xlu0 %v808, 1
    %v936 = vpop.permute.xlu0 %935
    %937 = vrot.lane.b32.xlu0 %v810, 1
    %v938 = vpop.permute.xlu0 %937
    %939 = vrot.lane.b32.xlu0 %v812, 1
    %v940 = vpop.permute.xlu0 %939
    %941 = vrot.lane.b32.xlu0 %v814, 1
    %v942 = vpop.permute.xlu0 %941
    %943 = vrot.lane.b32.xlu0 %v816, 1
    %v944 = vpop.permute.xlu0 %943
    %945 = vrot.lane.b32.xlu0 %v818, 1
    %v946 = vpop.permute.xlu0 %945
    %947 = vrot.lane.b32.xlu0 %v820, 1
    %v948 = vpop.permute.xlu0 %947
    %949 = vrot.lane.b32.xlu0 %v822, 1
    %v950 = vpop.permute.xlu0 %949
    %951 = vrot.lane.b32.xlu0 %v824, 1
    %v952 = vpop.permute.xlu0 %951
    %953 = vrot.lane.b32.xlu0 %v826, 1
    %v954 = vpop.permute.xlu0 %953
    %955 = vrot.lane.b32.xlu0 %v828, 1
    %v956 = vpop.permute.xlu0 %955
    %957 = vrot.lane.b32.xlu0 %v830, 1
    %v958 = vpop.permute.xlu0 %957
    %959 = vrot.lane.b32.xlu0 %v832, 1
    %v960 = vpop.permute.xlu0 %959
    %vm961 = vcmp.lt.s32.totalorder %v57, 1
    %v962 = vsel %vm961, %v834, %v898
    %v963 = vsel %vm961, %v836, %v900
    %v964 = vsel %vm961, %v838, %v902
    %v965 = vsel %vm961, %v840, %v904
    %v966 = vsel %vm961, %v842, %v906
    %v967 = vsel %vm961, %v844, %v908
    %v968 = vsel %vm961, %v846, %v910
    %v969 = vsel %vm961, %v848, %v912
    %v970 = vsel %vm961, %v850, %v914
    %v971 = vsel %vm961, %v852, %v916
    %v972 = vsel %vm961, %v854, %v918
    %v973 = vsel %vm961, %v856, %v920
    %v974 = vsel %vm961, %v858, %v922
    %v975 = vsel %vm961, %v860, %v924
    %v976 = vsel %vm961, %v862, %v926
    %v977 = vsel %vm961, %v864, %v928
    %v978 = vsel %vm961, %v866, %v930
    %v979 = vsel %vm961, %v868, %v932
    %v980 = vsel %vm961, %v870, %v934
    %v981 = vsel %vm961, %v872, %v936
    %v982 = vsel %vm961, %v874, %v938
    %v983 = vsel %vm961, %v876, %v940
    %v984 = vsel %vm961, %v878, %v942
    %v985 = vsel %vm961, %v880, %v944
    %v986 = vsel %vm961, %v882, %v946
    %v987 = vsel %vm961, %v884, %v948
    %v988 = vsel %vm961, %v886, %v950
    %v989 = vsel %vm961, %v888, %v952
    %v990 = vsel %vm961, %v890, %v954
    %v991 = vsel %vm961, %v892, %v956
    %v992 = vsel %vm961, %v894, %v958
    %v993 = vsel %vm961, %v896, %v960
    %v994 = vsel %vm961, %v898, %v834
    %v995 = vsel %vm961, %v900, %v836
    %v996 = vsel %vm961, %v902, %v838
    %v997 = vsel %vm961, %v904, %v840
    %v998 = vsel %vm961, %v906, %v842
    %v999 = vsel %vm961, %v908, %v844
    %v1000 = vsel %vm961, %v910, %v846
    %v1001 = vsel %vm961, %v912, %v848
    %v1002 = vsel %vm961, %v914, %v850
    %v1003 = vsel %vm961, %v916, %v852
    %v1004 = vsel %vm961, %v918, %v854
    %v1005 = vsel %vm961, %v920, %v856
    %v1006 = vsel %vm961, %v922, %v858
    %v1007 = vsel %vm961, %v924, %v860
    %v1008 = vsel %vm961, %v926, %v862
    %v1009 = vsel %vm961, %v928, %v864
    %v1010 = vsel %vm961, %v930, %v866
    %v1011 = vsel %vm961, %v932, %v868
    %v1012 = vsel %vm961, %v934, %v870
    %v1013 = vsel %vm961, %v936, %v872
    %v1014 = vsel %vm961, %v938, %v874
    %v1015 = vsel %vm961, %v940, %v876
    %v1016 = vsel %vm961, %v942, %v878
    %v1017 = vsel %vm961, %v944, %v880
    %v1018 = vsel %vm961, %v946, %v882
    %v1019 = vsel %vm961, %v948, %v884
    %v1020 = vsel %vm961, %v950, %v886
    %v1021 = vsel %vm961, %v952, %v888
    %v1022 = vsel %vm961, %v954, %v890
    %v1023 = vsel %vm961, %v956, %v892
    %v1024 = vsel %vm961, %v958, %v894
    %v1025 = vsel %vm961, %v960, %v896
    %v1026 = vsel %vm123, 1, 0
    %v1027 = vsel %vm124, 1, 0
    %vm1028 = vcmp.eq.s32.totalorder %v1026, 1
    %vm1029 = vcmp.eq.s32.totalorder %v1027, 1
    %v1030 = vsel %vm1028, %v994, 0.0
    %v1031 = vsel %vm1029, %v962, 0.0
    %v1032 = vsel %vm1028, %v995, 0.0
    %v1033 = vsel %vm1029, %v963, 0.0
    %v1034 = vsel %vm1028, %v996, 0.0
    %v1035 = vsel %vm1029, %v964, 0.0
    %v1036 = vsel %vm1028, %v997, 0.0
    %v1037 = vsel %vm1029, %v965, 0.0
    %v1038 = vsel %vm1028, %v998, 0.0
    %v1039 = vsel %vm1029, %v966, 0.0
    %v1040 = vsel %vm1028, %v999, 0.0
    %v1041 = vsel %vm1029, %v967, 0.0
    %v1042 = vsel %vm1028, %v1000, 0.0
    %v1043 = vsel %vm1029, %v968, 0.0
    %v1044 = vsel %vm1028, %v1001, 0.0
    %v1045 = vsel %vm1029, %v969, 0.0
    %v1046 = vsel %vm1028, %v1002, 0.0
    %v1047 = vsel %vm1029, %v970, 0.0
    %v1048 = vsel %vm1028, %v1003, 0.0
    %v1049 = vsel %vm1029, %v971, 0.0
    %v1050 = vsel %vm1028, %v1004, 0.0
    %v1051 = vsel %vm1029, %v972, 0.0
    %v1052 = vsel %vm1028, %v1005, 0.0
    %v1053 = vsel %vm1029, %v973, 0.0
    %v1054 = vsel %vm1028, %v1006, 0.0
    %v1055 = vsel %vm1029, %v974, 0.0
    %v1056 = vsel %vm1028, %v1007, 0.0
    %v1057 = vsel %vm1029, %v975, 0.0
    %v1058 = vsel %vm1028, %v1008, 0.0
    %v1059 = vsel %vm1029, %v976, 0.0
    %v1060 = vsel %vm1028, %v1009, 0.0
    %v1061 = vsel %vm1029, %v977, 0.0
    %v1062 = vsel %vm1028, %v1010, 0.0
    %v1063 = vsel %vm1029, %v978, 0.0
    %v1064 = vsel %vm1028, %v1011, 0.0
    %v1065 = vsel %vm1029, %v979, 0.0
    %v1066 = vsel %vm1028, %v1012, 0.0
    %v1067 = vsel %vm1029, %v980, 0.0
    %v1068 = vsel %vm1028, %v1013, 0.0
    %v1069 = vsel %vm1029, %v981, 0.0
    %v1070 = vsel %vm1028, %v1014, 0.0
    %v1071 = vsel %vm1029, %v982, 0.0
    %v1072 = vsel %vm1028, %v1015, 0.0
    %v1073 = vsel %vm1029, %v983, 0.0
    %v1074 = vsel %vm1028, %v1016, 0.0
    %v1075 = vsel %vm1029, %v984, 0.0
    %v1076 = vsel %vm1028, %v1017, 0.0
    %v1077 = vsel %vm1029, %v985, 0.0
    %v1078 = vsel %vm1028, %v1018, 0.0
    %v1079 = vsel %vm1029, %v986, 0.0
    %v1080 = vsel %vm1028, %v1019, 0.0
    %v1081 = vsel %vm1029, %v987, 0.0
    %v1082 = vsel %vm1028, %v1020, 0.0
    %v1083 = vsel %vm1029, %v988, 0.0
    %v1084 = vsel %vm1028, %v1021, 0.0
    %v1085 = vsel %vm1029, %v989, 0.0
    %v1086 = vsel %vm1028, %v1022, 0.0
    %v1087 = vsel %vm1029, %v990, 0.0
    %v1088 = vsel %vm1028, %v1023, 0.0
    %v1089 = vsel %vm1029, %v991, 0.0
    %v1090 = vsel %vm1028, %v1024, 0.0
    %v1091 = vsel %vm1029, %v992, 0.0
    %v1092 = vsel %vm1028, %v1025, 0.0
    %v1093 = vsel %vm1029, %v993, 0.0
    %1094 = vrot.lane.b32.xlu0 %v769, 127
    %v1095 = vpop.permute.xlu0 %1094
    %1096 = vrot.lane.b32.xlu0 %v771, 127
    %v1097 = vpop.permute.xlu0 %1096
    %1098 = vrot.lane.b32.xlu0 %v773, 127
    %v1099 = vpop.permute.xlu0 %1098
    %1100 = vrot.lane.b32.xlu0 %v775, 127
    %v1101 = vpop.permute.xlu0 %1100
    %1102 = vrot.lane.b32.xlu0 %v777, 127
    %v1103 = vpop.permute.xlu0 %1102
    %1104 = vrot.lane.b32.xlu0 %v779, 127
    %v1105 = vpop.permute.xlu0 %1104
    %1106 = vrot.lane.b32.xlu0 %v781, 127
    %v1107 = vpop.permute.xlu0 %1106
    %1108 = vrot.lane.b32.xlu0 %v783, 127
    %v1109 = vpop.permute.xlu0 %1108
    %1110 = vrot.lane.b32.xlu0 %v785, 127
    %v1111 = vpop.permute.xlu0 %1110
    %1112 = vrot.lane.b32.xlu0 %v787, 127
    %v1113 = vpop.permute.xlu0 %1112
    %1114 = vrot.lane.b32.xlu0 %v789, 127
    %v1115 = vpop.permute.xlu0 %1114
    %1116 = vrot.lane.b32.xlu0 %v791, 127
    %v1117 = vpop.permute.xlu0 %1116
    %1118 = vrot.lane.b32.xlu0 %v793, 127
    %v1119 = vpop.permute.xlu0 %1118
    %1120 = vrot.lane.b32.xlu0 %v795, 127
    %v1121 = vpop.permute.xlu0 %1120
    %1122 = vrot.lane.b32.xlu0 %v797, 127
    %v1123 = vpop.permute.xlu0 %1122
    %1124 = vrot.lane.b32.xlu0 %v799, 127
    %v1125 = vpop.permute.xlu0 %1124
    %1126 = vrot.lane.b32.xlu0 %v801, 127
    %v1127 = vpop.permute.xlu0 %1126
    %1128 = vrot.lane.b32.xlu0 %v803, 127
    %v1129 = vpop.permute.xlu0 %1128
    %1130 = vrot.lane.b32.xlu0 %v805, 127
    %v1131 = vpop.permute.xlu0 %1130
    %1132 = vrot.lane.b32.xlu0 %v807, 127
    %v1133 = vpop.permute.xlu0 %1132
    %1134 = vrot.lane.b32.xlu0 %v809, 127
    %v1135 = vpop.permute.xlu0 %1134
    %1136 = vrot.lane.b32.xlu0 %v811, 127
    %v1137 = vpop.permute.xlu0 %1136
    %1138 = vrot.lane.b32.xlu0 %v813, 127
    %v1139 = vpop.permute.xlu0 %1138
    %1140 = vrot.lane.b32.xlu0 %v815, 127
    %v1141 = vpop.permute.xlu0 %1140
    %1142 = vrot.lane.b32.xlu0 %v817, 127
    %v1143 = vpop.permute.xlu0 %1142
    %1144 = vrot.lane.b32.xlu0 %v819, 127
    %v1145 = vpop.permute.xlu0 %1144
    %1146 = vrot.lane.b32.xlu0 %v821, 127
    %v1147 = vpop.permute.xlu0 %1146
    %1148 = vrot.lane.b32.xlu0 %v823, 127
    %v1149 = vpop.permute.xlu0 %1148
    %1150 = vrot.lane.b32.xlu0 %v825, 127
    %v1151 = vpop.permute.xlu0 %1150
    %1152 = vrot.lane.b32.xlu0 %v827, 127
    %v1153 = vpop.permute.xlu0 %1152
    %1154 = vrot.lane.b32.xlu0 %v829, 127
    %v1155 = vpop.permute.xlu0 %1154
    %1156 = vrot.lane.b32.xlu0 %v831, 127
    %v1157 = vpop.permute.xlu0 %1156
    %1158 = vrot.lane.b32.xlu0 %v770, 127
    %v1159 = vpop.permute.xlu0 %1158
    %1160 = vrot.lane.b32.xlu0 %v772, 127
    %v1161 = vpop.permute.xlu0 %1160
    %1162 = vrot.lane.b32.xlu0 %v774, 127
    %v1163 = vpop.permute.xlu0 %1162
    %1164 = vrot.lane.b32.xlu0 %v776, 127
    %v1165 = vpop.permute.xlu0 %1164
    %1166 = vrot.lane.b32.xlu0 %v778, 127
    %v1167 = vpop.permute.xlu0 %1166
    %1168 = vrot.lane.b32.xlu0 %v780, 127
    %v1169 = vpop.permute.xlu0 %1168
    %1170 = vrot.lane.b32.xlu0 %v782, 127
    %v1171 = vpop.permute.xlu0 %1170
    %1172 = vrot.lane.b32.xlu0 %v784, 127
    %v1173 = vpop.permute.xlu0 %1172
    %1174 = vrot.lane.b32.xlu0 %v786, 127
    %v1175 = vpop.permute.xlu0 %1174
    %1176 = vrot.lane.b32.xlu0 %v788, 127
    %v1177 = vpop.permute.xlu0 %1176
    %1178 = vrot.lane.b32.xlu0 %v790, 127
    %v1179 = vpop.permute.xlu0 %1178
    %1180 = vrot.lane.b32.xlu0 %v792, 127
    %v1181 = vpop.permute.xlu0 %1180
    %1182 = vrot.lane.b32.xlu0 %v794, 127
    %v1183 = vpop.permute.xlu0 %1182
    %1184 = vrot.lane.b32.xlu0 %v796, 127
    %v1185 = vpop.permute.xlu0 %1184
    %1186 = vrot.lane.b32.xlu0 %v798, 127
    %v1187 = vpop.permute.xlu0 %1186
    %1188 = vrot.lane.b32.xlu0 %v800, 127
    %v1189 = vpop.permute.xlu0 %1188
    %1190 = vrot.lane.b32.xlu0 %v802, 127
    %v1191 = vpop.permute.xlu0 %1190
    %1192 = vrot.lane.b32.xlu0 %v804, 127
    %v1193 = vpop.permute.xlu0 %1192
    %1194 = vrot.lane.b32.xlu0 %v806, 127
    %v1195 = vpop.permute.xlu0 %1194
    %1196 = vrot.lane.b32.xlu0 %v808, 127
    %v1197 = vpop.permute.xlu0 %1196
    %1198 = vrot.lane.b32.xlu0 %v810, 127
    %v1199 = vpop.permute.xlu0 %1198
    %1200 = vrot.lane.b32.xlu0 %v812, 127
    %v1201 = vpop.permute.xlu0 %1200
    %1202 = vrot.lane.b32.xlu0 %v814, 127
    %v1203 = vpop.permute.xlu0 %1202
    %1204 = vrot.lane.b32.xlu0 %v816, 127
    %v1205 = vpop.permute.xlu0 %1204
    %1206 = vrot.lane.b32.xlu0 %v818, 127
    %v1207 = vpop.permute.xlu0 %1206
    %1208 = vrot.lane.b32.xlu0 %v820, 127
    %v1209 = vpop.permute.xlu0 %1208
    %1210 = vrot.lane.b32.xlu0 %v822, 127
    %v1211 = vpop.permute.xlu0 %1210
    %1212 = vrot.lane.b32.xlu0 %v824, 127
    %v1213 = vpop.permute.xlu0 %1212
    %1214 = vrot.lane.b32.xlu0 %v826, 127
    %v1215 = vpop.permute.xlu0 %1214
    %1216 = vrot.lane.b32.xlu0 %v828, 127
    %v1217 = vpop.permute.xlu0 %1216
    %1218 = vrot.lane.b32.xlu0 %v830, 127
    %v1219 = vpop.permute.xlu0 %1218
    %1220 = vrot.lane.b32.xlu0 %v832, 127
    %v1221 = vpop.permute.xlu0 %1220
    %vm1222 = vcmp.lt.s32.totalorder %v57, 127
    %v1223 = vsel %vm1222, %v1095, %v1159
    %v1224 = vsel %vm1222, %v1097, %v1161
    %v1225 = vsel %vm1222, %v1099, %v1163
    %v1226 = vsel %vm1222, %v1101, %v1165
    %v1227 = vsel %vm1222, %v1103, %v1167
    %v1228 = vsel %vm1222, %v1105, %v1169
    %v1229 = vsel %vm1222, %v1107, %v1171
    %v1230 = vsel %vm1222, %v1109, %v1173
    %v1231 = vsel %vm1222, %v1111, %v1175
    %v1232 = vsel %vm1222, %v1113, %v1177
    %v1233 = vsel %vm1222, %v1115, %v1179
    %v1234 = vsel %vm1222, %v1117, %v1181
    %v1235 = vsel %vm1222, %v1119, %v1183
    %v1236 = vsel %vm1222, %v1121, %v1185
    %v1237 = vsel %vm1222, %v1123, %v1187
    %v1238 = vsel %vm1222, %v1125, %v1189
    %v1239 = vsel %vm1222, %v1127, %v1191
    %v1240 = vsel %vm1222, %v1129, %v1193
    %v1241 = vsel %vm1222, %v1131, %v1195
    %v1242 = vsel %vm1222, %v1133, %v1197
    %v1243 = vsel %vm1222, %v1135, %v1199
    %v1244 = vsel %vm1222, %v1137, %v1201
    %v1245 = vsel %vm1222, %v1139, %v1203
    %v1246 = vsel %vm1222, %v1141, %v1205
    %v1247 = vsel %vm1222, %v1143, %v1207
    %v1248 = vsel %vm1222, %v1145, %v1209
    %v1249 = vsel %vm1222, %v1147, %v1211
    %v1250 = vsel %vm1222, %v1149, %v1213
    %v1251 = vsel %vm1222, %v1151, %v1215
    %v1252 = vsel %vm1222, %v1153, %v1217
    %v1253 = vsel %vm1222, %v1155, %v1219
    %v1254 = vsel %vm1222, %v1157, %v1221
    %v1255 = vsel %vm1222, %v1159, %v1095
    %v1256 = vsel %vm1222, %v1161, %v1097
    %v1257 = vsel %vm1222, %v1163, %v1099
    %v1258 = vsel %vm1222, %v1165, %v1101
    %v1259 = vsel %vm1222, %v1167, %v1103
    %v1260 = vsel %vm1222, %v1169, %v1105
    %v1261 = vsel %vm1222, %v1171, %v1107
    %v1262 = vsel %vm1222, %v1173, %v1109
    %v1263 = vsel %vm1222, %v1175, %v1111
    %v1264 = vsel %vm1222, %v1177, %v1113
    %v1265 = vsel %vm1222, %v1179, %v1115
    %v1266 = vsel %vm1222, %v1181, %v1117
    %v1267 = vsel %vm1222, %v1183, %v1119
    %v1268 = vsel %vm1222, %v1185, %v1121
    %v1269 = vsel %vm1222, %v1187, %v1123
    %v1270 = vsel %vm1222, %v1189, %v1125
    %v1271 = vsel %vm1222, %v1191, %v1127
    %v1272 = vsel %vm1222, %v1193, %v1129
    %v1273 = vsel %vm1222, %v1195, %v1131
    %v1274 = vsel %vm1222, %v1197, %v1133
    %v1275 = vsel %vm1222, %v1199, %v1135
    %v1276 = vsel %vm1222, %v1201, %v1137
    %v1277 = vsel %vm1222, %v1203, %v1139
    %v1278 = vsel %vm1222, %v1205, %v1141
    %v1279 = vsel %vm1222, %v1207, %v1143
    %v1280 = vsel %vm1222, %v1209, %v1145
    %v1281 = vsel %vm1222, %v1211, %v1147
    %v1282 = vsel %vm1222, %v1213, %v1149
    %v1283 = vsel %vm1222, %v1215, %v1151
    %v1284 = vsel %vm1222, %v1217, %v1153
    %v1285 = vsel %vm1222, %v1219, %v1155
    %v1286 = vsel %vm1222, %v1221, %v1157
    %v1287 = vsel %vm125, 1, 0
    %v1288 = vsel %vm126, 1, 0
    %vm1289 = vcmp.eq.s32.totalorder %v1287, 1
    %vm1290 = vcmp.eq.s32.totalorder %v1288, 1
    %v1291 = vsel %vm1289, %v1223, 0.0
    %v1292 = vsel %vm1290, %v1255, 0.0
    %v1293 = vsel %vm1289, %v1224, 0.0
    %v1294 = vsel %vm1290, %v1256, 0.0
    %v1295 = vsel %vm1289, %v1225, 0.0
    %v1296 = vsel %vm1290, %v1257, 0.0
    %v1297 = vsel %vm1289, %v1226, 0.0
    %v1298 = vsel %vm1290, %v1258, 0.0
    %v1299 = vsel %vm1289, %v1227, 0.0
    %v1300 = vsel %vm1290, %v1259, 0.0
    %v1301 = vsel %vm1289, %v1228, 0.0
    %v1302 = vsel %vm1290, %v1260, 0.0
    %v1303 = vsel %vm1289, %v1229, 0.0
    %v1304 = vsel %vm1290, %v1261, 0.0
    %v1305 = vsel %vm1289, %v1230, 0.0
    %v1306 = vsel %vm1290, %v1262, 0.0
    %v1307 = vsel %vm1289, %v1231, 0.0
    %v1308 = vsel %vm1290, %v1263, 0.0
    %v1309 = vsel %vm1289, %v1232, 0.0
    %v1310 = vsel %vm1290, %v1264, 0.0
    %v1311 = vsel %vm1289, %v1233, 0.0
    %v1312 = vsel %vm1290, %v1265, 0.0
    %v1313 = vsel %vm1289, %v1234, 0.0
    %v1314 = vsel %vm1290, %v1266, 0.0
    %v1315 = vsel %vm1289, %v1235, 0.0
    %v1316 = vsel %vm1290, %v1267, 0.0
    %v1317 = vsel %vm1289, %v1236, 0.0
    %v1318 = vsel %vm1290, %v1268, 0.0
    %v1319 = vsel %vm1289, %v1237, 0.0
    %v1320 = vsel %vm1290, %v1269, 0.0
    %v1321 = vsel %vm1289, %v1238, 0.0
    %v1322 = vsel %vm1290, %v1270, 0.0
    %v1323 = vsel %vm1289, %v1239, 0.0
    %v1324 = vsel %vm1290, %v1271, 0.0
    %v1325 = vsel %vm1289, %v1240, 0.0
    %v1326 = vsel %vm1290, %v1272, 0.0
    %v1327 = vsel %vm1289, %v1241, 0.0
    %v1328 = vsel %vm1290, %v1273, 0.0
    %v1329 = vsel %vm1289, %v1242, 0.0
    %v1330 = vsel %vm1290, %v1274, 0.0
    %v1331 = vsel %vm1289, %v1243, 0.0
    %v1332 = vsel %vm1290, %v1275, 0.0
    %v1333 = vsel %vm1289, %v1244, 0.0
    %v1334 = vsel %vm1290, %v1276, 0.0
    %v1335 = vsel %vm1289, %v1245, 0.0
    %v1336 = vsel %vm1290, %v1277, 0.0
    %v1337 = vsel %vm1289, %v1246, 0.0
    %v1338 = vsel %vm1290, %v1278, 0.0
    %v1339 = vsel %vm1289, %v1247, 0.0
    %v1340 = vsel %vm1290, %v1279, 0.0
    %v1341 = vsel %vm1289, %v1248, 0.0
    %v1342 = vsel %vm1290, %v1280, 0.0
    %v1343 = vsel %vm1289, %v1249, 0.0
    %v1344 = vsel %vm1290, %v1281, 0.0
    %v1345 = vsel %vm1289, %v1250, 0.0
    %v1346 = vsel %vm1290, %v1282, 0.0
    %v1347 = vsel %vm1289, %v1251, 0.0
    %v1348 = vsel %vm1290, %v1283, 0.0
    %v1349 = vsel %vm1289, %v1252, 0.0
    %v1350 = vsel %vm1290, %v1284, 0.0
    %v1351 = vsel %vm1289, %v1253, 0.0
    %v1352 = vsel %vm1290, %v1285, 0.0
    %v1353 = vsel %vm1289, %v1254, 0.0
    %v1354 = vsel %vm1290, %v1286, 0.0
    %v1355 = vmax.f32 %v1030, %v1291
    %v1356 = vmax.f32 %v1031, %v1292
    %v1357 = vmax.f32 %v1032, %v1293
    %v1358 = vmax.f32 %v1033, %v1294
    %v1359 = vmax.f32 %v1034, %v1295
    %v1360 = vmax.f32 %v1035, %v1296
    %v1361 = vmax.f32 %v1036, %v1297
    %v1362 = vmax.f32 %v1037, %v1298
    %v1363 = vmax.f32 %v1038, %v1299
    %v1364 = vmax.f32 %v1039, %v1300
    %v1365 = vmax.f32 %v1040, %v1301
    %v1366 = vmax.f32 %v1041, %v1302
    %v1367 = vmax.f32 %v1042, %v1303
    %v1368 = vmax.f32 %v1043, %v1304
    %v1369 = vmax.f32 %v1044, %v1305
    %v1370 = vmax.f32 %v1045, %v1306
    %v1371 = vmax.f32 %v1046, %v1307
    %v1372 = vmax.f32 %v1047, %v1308
    %v1373 = vmax.f32 %v1048, %v1309
    %v1374 = vmax.f32 %v1049, %v1310
    %v1375 = vmax.f32 %v1050, %v1311
    %v1376 = vmax.f32 %v1051, %v1312
    %v1377 = vmax.f32 %v1052, %v1313
    %v1378 = vmax.f32 %v1053, %v1314
    %v1379 = vmax.f32 %v1054, %v1315
    %v1380 = vmax.f32 %v1055, %v1316
    %v1381 = vmax.f32 %v1056, %v1317
    %v1382 = vmax.f32 %v1057, %v1318
    %v1383 = vmax.f32 %v1058, %v1319
    %v1384 = vmax.f32 %v1059, %v1320
    %v1385 = vmax.f32 %v1060, %v1321
    %v1386 = vmax.f32 %v1061, %v1322
    %v1387 = vmax.f32 %v1062, %v1323
    %v1388 = vmax.f32 %v1063, %v1324
    %v1389 = vmax.f32 %v1064, %v1325
    %v1390 = vmax.f32 %v1065, %v1326
    %v1391 = vmax.f32 %v1066, %v1327
    %v1392 = vmax.f32 %v1067, %v1328
    %v1393 = vmax.f32 %v1068, %v1329
    %v1394 = vmax.f32 %v1069, %v1330
    %v1395 = vmax.f32 %v1070, %v1331
    %v1396 = vmax.f32 %v1071, %v1332
    %v1397 = vmax.f32 %v1072, %v1333
    %v1398 = vmax.f32 %v1073, %v1334
    %v1399 = vmax.f32 %v1074, %v1335
    %v1400 = vmax.f32 %v1075, %v1336
    %v1401 = vmax.f32 %v1076, %v1337
    %v1402 = vmax.f32 %v1077, %v1338
    %v1403 = vmax.f32 %v1078, %v1339
    %v1404 = vmax.f32 %v1079, %v1340
    %v1405 = vmax.f32 %v1080, %v1341
    %v1406 = vmax.f32 %v1081, %v1342
    %v1407 = vmax.f32 %v1082, %v1343
    %v1408 = vmax.f32 %v1083, %v1344
    %v1409 = vmax.f32 %v1084, %v1345
    %v1410 = vmax.f32 %v1085, %v1346
    %v1411 = vmax.f32 %v1086, %v1347
    %v1412 = vmax.f32 %v1087, %v1348
    %v1413 = vmax.f32 %v1088, %v1349
    %v1414 = vmax.f32 %v1089, %v1350
    %v1415 = vmax.f32 %v1090, %v1351
    %v1416 = vmax.f32 %v1091, %v1352
    %v1417 = vmax.f32 %v1092, %v1353
    %v1418 = vmax.f32 %v1093, %v1354
    %v1419 = vmax.f32 %v769, %v1355
    %v1420 = vmax.f32 %v770, %v1356
    %v1421 = vmax.f32 %v771, %v1357
    %v1422 = vmax.f32 %v772, %v1358
    %v1423 = vmax.f32 %v773, %v1359
    %v1424 = vmax.f32 %v774, %v1360
    %v1425 = vmax.f32 %v775, %v1361
    %v1426 = vmax.f32 %v776, %v1362
    %v1427 = vmax.f32 %v777, %v1363
    %v1428 = vmax.f32 %v778, %v1364
    %v1429 = vmax.f32 %v779, %v1365
    %v1430 = vmax.f32 %v780, %v1366
    %v1431 = vmax.f32 %v781, %v1367
    %v1432 = vmax.f32 %v782, %v1368
    %v1433 = vmax.f32 %v783, %v1369
    %v1434 = vmax.f32 %v784, %v1370
    %v1435 = vmax.f32 %v785, %v1371
    %v1436 = vmax.f32 %v786, %v1372
    %v1437 = vmax.f32 %v787, %v1373
    %v1438 = vmax.f32 %v788, %v1374
    %v1439 = vmax.f32 %v789, %v1375
    %v1440 = vmax.f32 %v790, %v1376
    %v1441 = vmax.f32 %v791, %v1377
    %v1442 = vmax.f32 %v792, %v1378
    %v1443 = vmax.f32 %v793, %v1379
    %v1444 = vmax.f32 %v794, %v1380
    %v1445 = vmax.f32 %v795, %v1381
    %v1446 = vmax.f32 %v796, %v1382
    %v1447 = vmax.f32 %v797, %v1383
    %v1448 = vmax.f32 %v798, %v1384
    %v1449 = vmax.f32 %v799, %v1385
    %v1450 = vmax.f32 %v800, %v1386
    %v1451 = vmax.f32 %v801, %v1387
    %v1452 = vmax.f32 %v802, %v1388
    %v1453 = vmax.f32 %v803, %v1389
    %v1454 = vmax.f32 %v804, %v1390
    %v1455 = vmax.f32 %v805, %v1391
    %v1456 = vmax.f32 %v806, %v1392
    %v1457 = vmax.f32 %v807, %v1393
    %v1458 = vmax.f32 %v808, %v1394
    %v1459 = vmax.f32 %v809, %v1395
    %v1460 = vmax.f32 %v810, %v1396
    %v1461 = vmax.f32 %v811, %v1397
    %v1462 = vmax.f32 %v812, %v1398
    %v1463 = vmax.f32 %v813, %v1399
    %v1464 = vmax.f32 %v814, %v1400
    %v1465 = vmax.f32 %v815, %v1401
    %v1466 = vmax.f32 %v816, %v1402
    %v1467 = vmax.f32 %v817, %v1403
    %v1468 = vmax.f32 %v818, %v1404
    %v1469 = vmax.f32 %v819, %v1405
    %v1470 = vmax.f32 %v820, %v1406
    %v1471 = vmax.f32 %v821, %v1407
    %v1472 = vmax.f32 %v822, %v1408
    %v1473 = vmax.f32 %v823, %v1409
    %v1474 = vmax.f32 %v824, %v1410
    %v1475 = vmax.f32 %v825, %v1411
    %v1476 = vmax.f32 %v826, %v1412
    %v1477 = vmax.f32 %v827, %v1413
    %v1478 = vmax.f32 %v828, %v1414
    %v1479 = vmax.f32 %v829, %v1415
    %v1480 = vmax.f32 %v830, %v1416
    %v1481 = vmax.f32 %v831, %v1417
    %v1482 = vmax.f32 %v832, %v1418
    %v1483 = vrot.slane %v1419, 7
    %v1484 = vrot.slane %v1420, 7
    %v1485 = vrot.slane %v1421, 7
    %v1486 = vrot.slane %v1422, 7
    %v1487 = vrot.slane %v1423, 7
    %v1488 = vrot.slane %v1424, 7
    %v1489 = vrot.slane %v1425, 7
    %v1490 = vrot.slane %v1426, 7
    %v1491 = vrot.slane %v1427, 7
    %v1492 = vrot.slane %v1428, 7
    %v1493 = vrot.slane %v1429, 7
    %v1494 = vrot.slane %v1430, 7
    %v1495 = vrot.slane %v1431, 7
    %v1496 = vrot.slane %v1432, 7
    %v1497 = vrot.slane %v1433, 7
    %v1498 = vrot.slane %v1434, 7
    %v1499 = vrot.slane %v1435, 7
    %v1500 = vrot.slane %v1436, 7
    %v1501 = vrot.slane %v1437, 7
    %v1502 = vrot.slane %v1438, 7
    %v1503 = vrot.slane %v1439, 7
    %v1504 = vrot.slane %v1440, 7
    %v1505 = vrot.slane %v1441, 7
    %v1506 = vrot.slane %v1442, 7
    %v1507 = vrot.slane %v1443, 7
    %v1508 = vrot.slane %v1444, 7
    %v1509 = vrot.slane %v1445, 7
    %v1510 = vrot.slane %v1446, 7
    %v1511 = vrot.slane %v1447, 7
    %v1512 = vrot.slane %v1448, 7
    %v1513 = vrot.slane %v1449, 7
    %v1514 = vrot.slane %v1450, 7
    %v1515 = vrot.slane %v1451, 7
    %v1516 = vrot.slane %v1452, 7
    %v1517 = vrot.slane %v1453, 7
    %v1518 = vrot.slane %v1454, 7
    %v1519 = vrot.slane %v1455, 7
    %v1520 = vrot.slane %v1456, 7
    %v1521 = vrot.slane %v1457, 7
    %v1522 = vrot.slane %v1458, 7
    %v1523 = vrot.slane %v1459, 7
    %v1524 = vrot.slane %v1460, 7
    %v1525 = vrot.slane %v1461, 7
    %v1526 = vrot.slane %v1462, 7
    %v1527 = vrot.slane %v1463, 7
    %v1528 = vrot.slane %v1464, 7
    %v1529 = vrot.slane %v1465, 7
    %v1530 = vrot.slane %v1466, 7
    %v1531 = vrot.slane %v1467, 7
    %v1532 = vrot.slane %v1468, 7
    %v1533 = vrot.slane %v1469, 7
    %v1534 = vrot.slane %v1470, 7
    %v1535 = vrot.slane %v1471, 7
    %v1536 = vrot.slane %v1472, 7
    %v1537 = vrot.slane %v1473, 7
    %v1538 = vrot.slane %v1474, 7
    %v1539 = vrot.slane %v1475, 7
    %v1540 = vrot.slane %v1476, 7
    %v1541 = vrot.slane %v1477, 7
    %v1542 = vrot.slane %v1478, 7
    %v1543 = vrot.slane %v1479, 7
    %v1544 = vrot.slane %v1480, 7
    %v1545 = vrot.slane %v1481, 7
    %v1546 = vrot.slane %v1482, 7
    %v1547 = vsel %vm255, %v1543, %v1545
    %v1548 = vsel %vm255, %v1544, %v1546
    %v1549 = vsel %vm255, %v1541, %v1543
    %v1550 = vsel %vm255, %v1542, %v1544
    %v1551 = vsel %vm255, %v1539, %v1541
    %v1552 = vsel %vm255, %v1540, %v1542
    %v1553 = vsel %vm255, %v1537, %v1539
    %v1554 = vsel %vm255, %v1538, %v1540
    %v1555 = vsel %vm255, %v1535, %v1537
    %v1556 = vsel %vm255, %v1536, %v1538
    %v1557 = vsel %vm255, %v1533, %v1535
    %v1558 = vsel %vm255, %v1534, %v1536
    %v1559 = vsel %vm255, %v1531, %v1533
    %v1560 = vsel %vm255, %v1532, %v1534
    %v1561 = vsel %vm255, %v1529, %v1531
    %v1562 = vsel %vm255, %v1530, %v1532
    %v1563 = vsel %vm255, %v1527, %v1529
    %v1564 = vsel %vm255, %v1528, %v1530
    %v1565 = vsel %vm255, %v1525, %v1527
    %v1566 = vsel %vm255, %v1526, %v1528
    %v1567 = vsel %vm255, %v1523, %v1525
    %v1568 = vsel %vm255, %v1524, %v1526
    %v1569 = vsel %vm255, %v1521, %v1523
    %v1570 = vsel %vm255, %v1522, %v1524
    %v1571 = vsel %vm255, %v1519, %v1521
    %v1572 = vsel %vm255, %v1520, %v1522
    %v1573 = vsel %vm255, %v1517, %v1519
    %v1574 = vsel %vm255, %v1518, %v1520
    %v1575 = vsel %vm255, %v1515, %v1517
    %v1576 = vsel %vm255, %v1516, %v1518
    %v1577 = vsel %vm255, %v1513, %v1515
    %v1578 = vsel %vm255, %v1514, %v1516
    %v1579 = vsel %vm255, %v1511, %v1513
    %v1580 = vsel %vm255, %v1512, %v1514
    %v1581 = vsel %vm255, %v1509, %v1511
    %v1582 = vsel %vm255, %v1510, %v1512
    %v1583 = vsel %vm255, %v1507, %v1509
    %v1584 = vsel %vm255, %v1508, %v1510
    %v1585 = vsel %vm255, %v1505, %v1507
    %v1586 = vsel %vm255, %v1506, %v1508
    %v1587 = vsel %vm255, %v1503, %v1505
    %v1588 = vsel %vm255, %v1504, %v1506
    %v1589 = vsel %vm255, %v1501, %v1503
    %v1590 = vsel %vm255, %v1502, %v1504
    %v1591 = vsel %vm255, %v1499, %v1501
    %v1592 = vsel %vm255, %v1500, %v1502
    %v1593 = vsel %vm255, %v1497, %v1499
    %v1594 = vsel %vm255, %v1498, %v1500
    %v1595 = vsel %vm255, %v1495, %v1497
    %v1596 = vsel %vm255, %v1496, %v1498
    %v1597 = vsel %vm255, %v1493, %v1495
    %v1598 = vsel %vm255, %v1494, %v1496
    %v1599 = vsel %vm255, %v1491, %v1493
    %v1600 = vsel %vm255, %v1492, %v1494
    %v1601 = vsel %vm255, %v1489, %v1491
    %v1602 = vsel %vm255, %v1490, %v1492
    %v1603 = vsel %vm255, %v1487, %v1489
    %v1604 = vsel %vm255, %v1488, %v1490
    %v1605 = vsel %vm255, %v1485, %v1487
    %v1606 = vsel %vm255, %v1486, %v1488
    %v1607 = vsel %vm255, %v1483, %v1485
    %v1608 = vsel %vm255, %v1484, %v1486
    %v1609 = vsel %vm255, %v1545, %v1483
    %v1610 = vsel %vm255, %v1546, %v1484
    %v1611 = vsel %vm352, %v1609, 1.0
    %v1612 = vsel %vm352, %v1610, 1.0
    %v1613 = vsel %vm353, %v1607, 1.0
    %v1614 = vsel %vm353, %v1608, 1.0
    %v1615 = vsel %vm354, %v1605, 1.0
    %v1616 = vsel %vm354, %v1606, 1.0
    %v1617 = vsel %vm355, %v1603, 1.0
    %v1618 = vsel %vm355, %v1604, 1.0
    %v1619 = vsel %vm356, %v1601, 1.0
    %v1620 = vsel %vm356, %v1602, 1.0
    %v1621 = vsel %vm357, %v1599, 1.0
    %v1622 = vsel %vm357, %v1600, 1.0
    %v1623 = vsel %vm358, %v1597, 1.0
    %v1624 = vsel %vm358, %v1598, 1.0
    %v1625 = vsel %vm359, %v1595, 1.0
    %v1626 = vsel %vm359, %v1596, 1.0
    %v1627 = vsel %vm360, %v1593, 1.0
    %v1628 = vsel %vm360, %v1594, 1.0
    %v1629 = vsel %vm361, %v1591, 1.0
    %v1630 = vsel %vm361, %v1592, 1.0
    %v1631 = vsel %vm362, %v1589, 1.0
    %v1632 = vsel %vm362, %v1590, 1.0
    %v1633 = vsel %vm363, %v1587, 1.0
    %v1634 = vsel %vm363, %v1588, 1.0
    %v1635 = vsel %vm364, %v1585, 1.0
    %v1636 = vsel %vm364, %v1586, 1.0
    %v1637 = vsel %vm365, %v1583, 1.0
    %v1638 = vsel %vm365, %v1584, 1.0
    %v1639 = vsel %vm366, %v1581, 1.0
    %v1640 = vsel %vm366, %v1582, 1.0
    %v1641 = vsel %vm367, %v1579, 1.0
    %v1642 = vsel %vm367, %v1580, 1.0
    %v1643 = vsel %vm368, %v1577, 1.0
    %v1644 = vsel %vm368, %v1578, 1.0
    %v1645 = vsel %vm369, %v1575, 1.0
    %v1646 = vsel %vm369, %v1576, 1.0
    %v1647 = vsel %vm370, %v1573, 1.0
    %v1648 = vsel %vm370, %v1574, 1.0
    %v1649 = vsel %vm371, %v1571, 1.0
    %v1650 = vsel %vm371, %v1572, 1.0
    %v1651 = vsel %vm372, %v1569, 1.0
    %v1652 = vsel %vm372, %v1570, 1.0
    %v1653 = vsel %vm373, %v1567, 1.0
    %v1654 = vsel %vm373, %v1568, 1.0
    %v1655 = vsel %vm374, %v1565, 1.0
    %v1656 = vsel %vm374, %v1566, 1.0
    %v1657 = vsel %vm375, %v1563, 1.0
    %v1658 = vsel %vm375, %v1564, 1.0
    %v1659 = vsel %vm376, %v1561, 1.0
    %v1660 = vsel %vm376, %v1562, 1.0
    %v1661 = vsel %vm377, %v1559, 1.0
    %v1662 = vsel %vm377, %v1560, 1.0
    %v1663 = vsel %vm378, %v1557, 1.0
    %v1664 = vsel %vm378, %v1558, 1.0
    %v1665 = vsel %vm379, %v1555, 1.0
    %v1666 = vsel %vm379, %v1556, 1.0
    %v1667 = vsel %vm380, %v1553, 1.0
    %v1668 = vsel %vm380, %v1554, 1.0
    %v1669 = vsel %vm381, %v1551, 1.0
    %v1670 = vsel %vm381, %v1552, 1.0
    %v1671 = vsel %vm382, %v1549, 1.0
    %v1672 = vsel %vm382, %v1550, 1.0
    %v1673 = vsel %vm383, %v1547, 1.0
    %v1674 = vsel %vm383, %v1548, 1.0
    %v1675 = vrot.slane %v1419, 1
    %v1676 = vrot.slane %v1420, 1
    %v1677 = vrot.slane %v1421, 1
    %v1678 = vrot.slane %v1422, 1
    %v1679 = vrot.slane %v1423, 1
    %v1680 = vrot.slane %v1424, 1
    %v1681 = vrot.slane %v1425, 1
    %v1682 = vrot.slane %v1426, 1
    %v1683 = vrot.slane %v1427, 1
    %v1684 = vrot.slane %v1428, 1
    %v1685 = vrot.slane %v1429, 1
    %v1686 = vrot.slane %v1430, 1
    %v1687 = vrot.slane %v1431, 1
    %v1688 = vrot.slane %v1432, 1
    %v1689 = vrot.slane %v1433, 1
    %v1690 = vrot.slane %v1434, 1
    %v1691 = vrot.slane %v1435, 1
    %v1692 = vrot.slane %v1436, 1
    %v1693 = vrot.slane %v1437, 1
    %v1694 = vrot.slane %v1438, 1
    %v1695 = vrot.slane %v1439, 1
    %v1696 = vrot.slane %v1440, 1
    %v1697 = vrot.slane %v1441, 1
    %v1698 = vrot.slane %v1442, 1
    %v1699 = vrot.slane %v1443, 1
    %v1700 = vrot.slane %v1444, 1
    %v1701 = vrot.slane %v1445, 1
    %v1702 = vrot.slane %v1446, 1
    %v1703 = vrot.slane %v1447, 1
    %v1704 = vrot.slane %v1448, 1
    %v1705 = vrot.slane %v1449, 1
    %v1706 = vrot.slane %v1450, 1
    %v1707 = vrot.slane %v1451, 1
    %v1708 = vrot.slane %v1452, 1
    %v1709 = vrot.slane %v1453, 1
    %v1710 = vrot.slane %v1454, 1
    %v1711 = vrot.slane %v1455, 1
    %v1712 = vrot.slane %v1456, 1
    %v1713 = vrot.slane %v1457, 1
    %v1714 = vrot.slane %v1458, 1
    %v1715 = vrot.slane %v1459, 1
    %v1716 = vrot.slane %v1460, 1
    %v1717 = vrot.slane %v1461, 1
    %v1718 = vrot.slane %v1462, 1
    %v1719 = vrot.slane %v1463, 1
    %v1720 = vrot.slane %v1464, 1
    %v1721 = vrot.slane %v1465, 1
    %v1722 = vrot.slane %v1466, 1
    %v1723 = vrot.slane %v1467, 1
    %v1724 = vrot.slane %v1468, 1
    %v1725 = vrot.slane %v1469, 1
    %v1726 = vrot.slane %v1470, 1
    %v1727 = vrot.slane %v1471, 1
    %v1728 = vrot.slane %v1472, 1
    %v1729 = vrot.slane %v1473, 1
    %v1730 = vrot.slane %v1474, 1
    %v1731 = vrot.slane %v1475, 1
    %v1732 = vrot.slane %v1476, 1
    %v1733 = vrot.slane %v1477, 1
    %v1734 = vrot.slane %v1478, 1
    %v1735 = vrot.slane %v1479, 1
    %v1736 = vrot.slane %v1480, 1
    %v1737 = vrot.slane %v1481, 1
    %v1738 = vrot.slane %v1482, 1
    %v1739 = vsel %vm512, %v1735, %v1737
    %v1740 = vsel %vm512, %v1736, %v1738
    %v1741 = vsel %vm512, %v1733, %v1735
    %v1742 = vsel %vm512, %v1734, %v1736
    %v1743 = vsel %vm512, %v1731, %v1733
    %v1744 = vsel %vm512, %v1732, %v1734
    %v1745 = vsel %vm512, %v1729, %v1731
    %v1746 = vsel %vm512, %v1730, %v1732
    %v1747 = vsel %vm512, %v1727, %v1729
    %v1748 = vsel %vm512, %v1728, %v1730
    %v1749 = vsel %vm512, %v1725, %v1727
    %v1750 = vsel %vm512, %v1726, %v1728
    %v1751 = vsel %vm512, %v1723, %v1725
    %v1752 = vsel %vm512, %v1724, %v1726
    %v1753 = vsel %vm512, %v1721, %v1723
    %v1754 = vsel %vm512, %v1722, %v1724
    %v1755 = vsel %vm512, %v1719, %v1721
    %v1756 = vsel %vm512, %v1720, %v1722
    %v1757 = vsel %vm512, %v1717, %v1719
    %v1758 = vsel %vm512, %v1718, %v1720
    %v1759 = vsel %vm512, %v1715, %v1717
    %v1760 = vsel %vm512, %v1716, %v1718
    %v1761 = vsel %vm512, %v1713, %v1715
    %v1762 = vsel %vm512, %v1714, %v1716
    %v1763 = vsel %vm512, %v1711, %v1713
    %v1764 = vsel %vm512, %v1712, %v1714
    %v1765 = vsel %vm512, %v1709, %v1711
    %v1766 = vsel %vm512, %v1710, %v1712
    %v1767 = vsel %vm512, %v1707, %v1709
    %v1768 = vsel %vm512, %v1708, %v1710
    %v1769 = vsel %vm512, %v1705, %v1707
    %v1770 = vsel %vm512, %v1706, %v1708
    %v1771 = vsel %vm512, %v1703, %v1705
    %v1772 = vsel %vm512, %v1704, %v1706
    %v1773 = vsel %vm512, %v1701, %v1703
    %v1774 = vsel %vm512, %v1702, %v1704
    %v1775 = vsel %vm512, %v1699, %v1701
    %v1776 = vsel %vm512, %v1700, %v1702
    %v1777 = vsel %vm512, %v1697, %v1699
    %v1778 = vsel %vm512, %v1698, %v1700
    %v1779 = vsel %vm512, %v1695, %v1697
    %v1780 = vsel %vm512, %v1696, %v1698
    %v1781 = vsel %vm512, %v1693, %v1695
    %v1782 = vsel %vm512, %v1694, %v1696
    %v1783 = vsel %vm512, %v1691, %v1693
    %v1784 = vsel %vm512, %v1692, %v1694
    %v1785 = vsel %vm512, %v1689, %v1691
    %v1786 = vsel %vm512, %v1690, %v1692
    %v1787 = vsel %vm512, %v1687, %v1689
    %v1788 = vsel %vm512, %v1688, %v1690
    %v1789 = vsel %vm512, %v1685, %v1687
    %v1790 = vsel %vm512, %v1686, %v1688
    %v1791 = vsel %vm512, %v1683, %v1685
    %v1792 = vsel %vm512, %v1684, %v1686
    %v1793 = vsel %vm512, %v1681, %v1683
    %v1794 = vsel %vm512, %v1682, %v1684
    %v1795 = vsel %vm512, %v1679, %v1681
    %v1796 = vsel %vm512, %v1680, %v1682
    %v1797 = vsel %vm512, %v1677, %v1679
    %v1798 = vsel %vm512, %v1678, %v1680
    %v1799 = vsel %vm512, %v1675, %v1677
    %v1800 = vsel %vm512, %v1676, %v1678
    %v1801 = vsel %vm512, %v1737, %v1675
    %v1802 = vsel %vm512, %v1738, %v1676
    %v1803 = vsel %vm609, %v1799, 1.0
    %v1804 = vsel %vm609, %v1800, 1.0
    %v1805 = vsel %vm610, %v1797, 1.0
    %v1806 = vsel %vm610, %v1798, 1.0
    %v1807 = vsel %vm611, %v1795, 1.0
    %v1808 = vsel %vm611, %v1796, 1.0
    %v1809 = vsel %vm612, %v1793, 1.0
    %v1810 = vsel %vm612, %v1794, 1.0
    %v1811 = vsel %vm613, %v1791, 1.0
    %v1812 = vsel %vm613, %v1792, 1.0
    %v1813 = vsel %vm614, %v1789, 1.0
    %v1814 = vsel %vm614, %v1790, 1.0
    %v1815 = vsel %vm615, %v1787, 1.0
    %v1816 = vsel %vm615, %v1788, 1.0
    %v1817 = vsel %vm616, %v1785, 1.0
    %v1818 = vsel %vm616, %v1786, 1.0
    %v1819 = vsel %vm617, %v1783, 1.0
    %v1820 = vsel %vm617, %v1784, 1.0
    %v1821 = vsel %vm618, %v1781, 1.0
    %v1822 = vsel %vm618, %v1782, 1.0
    %v1823 = vsel %vm619, %v1779, 1.0
    %v1824 = vsel %vm619, %v1780, 1.0
    %v1825 = vsel %vm620, %v1777, 1.0
    %v1826 = vsel %vm620, %v1778, 1.0
    %v1827 = vsel %vm621, %v1775, 1.0
    %v1828 = vsel %vm621, %v1776, 1.0
    %v1829 = vsel %vm622, %v1773, 1.0
    %v1830 = vsel %vm622, %v1774, 1.0
    %v1831 = vsel %vm623, %v1771, 1.0
    %v1832 = vsel %vm623, %v1772, 1.0
    %v1833 = vsel %vm624, %v1769, 1.0
    %v1834 = vsel %vm624, %v1770, 1.0
    %v1835 = vsel %vm625, %v1767, 1.0
    %v1836 = vsel %vm625, %v1768, 1.0
    %v1837 = vsel %vm626, %v1765, 1.0
    %v1838 = vsel %vm626, %v1766, 1.0
    %v1839 = vsel %vm627, %v1763, 1.0
    %v1840 = vsel %vm627, %v1764, 1.0
    %v1841 = vsel %vm628, %v1761, 1.0
    %v1842 = vsel %vm628, %v1762, 1.0
    %v1843 = vsel %vm629, %v1759, 1.0
    %v1844 = vsel %vm629, %v1760, 1.0
    %v1845 = vsel %vm630, %v1757, 1.0
    %v1846 = vsel %vm630, %v1758, 1.0
    %v1847 = vsel %vm631, %v1755, 1.0
    %v1848 = vsel %vm631, %v1756, 1.0
    %v1849 = vsel %vm632, %v1753, 1.0
    %v1850 = vsel %vm632, %v1754, 1.0
    %v1851 = vsel %vm633, %v1751, 1.0
    %v1852 = vsel %vm633, %v1752, 1.0
    %v1853 = vsel %vm634, %v1749, 1.0
    %v1854 = vsel %vm634, %v1750, 1.0
    %v1855 = vsel %vm635, %v1747, 1.0
    %v1856 = vsel %vm635, %v1748, 1.0
    %v1857 = vsel %vm636, %v1745, 1.0
    %v1858 = vsel %vm636, %v1746, 1.0
    %v1859 = vsel %vm637, %v1743, 1.0
    %v1860 = vsel %vm637, %v1744, 1.0
    %v1861 = vsel %vm638, %v1741, 1.0
    %v1862 = vsel %vm638, %v1742, 1.0
    %v1863 = vsel %vm639, %v1739, 1.0
    %v1864 = vsel %vm639, %v1740, 1.0
    %v1865 = vsel %vm640, %v1801, 1.0
    %v1866 = vsel %vm640, %v1802, 1.0
    %v1867 = vmin.f32 %v1611, %v1803
    %v1868 = vmin.f32 %v1612, %v1804
    %v1869 = vmin.f32 %v1613, %v1805
    %v1870 = vmin.f32 %v1614, %v1806
    %v1871 = vmin.f32 %v1615, %v1807
    %v1872 = vmin.f32 %v1616, %v1808
    %v1873 = vmin.f32 %v1617, %v1809
    %v1874 = vmin.f32 %v1618, %v1810
    %v1875 = vmin.f32 %v1619, %v1811
    %v1876 = vmin.f32 %v1620, %v1812
    %v1877 = vmin.f32 %v1621, %v1813
    %v1878 = vmin.f32 %v1622, %v1814
    %v1879 = vmin.f32 %v1623, %v1815
    %v1880 = vmin.f32 %v1624, %v1816
    %v1881 = vmin.f32 %v1625, %v1817
    %v1882 = vmin.f32 %v1626, %v1818
    %v1883 = vmin.f32 %v1627, %v1819
    %v1884 = vmin.f32 %v1628, %v1820
    %v1885 = vmin.f32 %v1629, %v1821
    %v1886 = vmin.f32 %v1630, %v1822
    %v1887 = vmin.f32 %v1631, %v1823
    %v1888 = vmin.f32 %v1632, %v1824
    %v1889 = vmin.f32 %v1633, %v1825
    %v1890 = vmin.f32 %v1634, %v1826
    %v1891 = vmin.f32 %v1635, %v1827
    %v1892 = vmin.f32 %v1636, %v1828
    %v1893 = vmin.f32 %v1637, %v1829
    %v1894 = vmin.f32 %v1638, %v1830
    %v1895 = vmin.f32 %v1639, %v1831
    %v1896 = vmin.f32 %v1640, %v1832
    %v1897 = vmin.f32 %v1641, %v1833
    %v1898 = vmin.f32 %v1642, %v1834
    %v1899 = vmin.f32 %v1643, %v1835
    %v1900 = vmin.f32 %v1644, %v1836
    %v1901 = vmin.f32 %v1645, %v1837
    %v1902 = vmin.f32 %v1646, %v1838
    %v1903 = vmin.f32 %v1647, %v1839
    %v1904 = vmin.f32 %v1648, %v1840
    %v1905 = vmin.f32 %v1649, %v1841
    %v1906 = vmin.f32 %v1650, %v1842
    %v1907 = vmin.f32 %v1651, %v1843
    %v1908 = vmin.f32 %v1652, %v1844
    %v1909 = vmin.f32 %v1653, %v1845
    %v1910 = vmin.f32 %v1654, %v1846
    %v1911 = vmin.f32 %v1655, %v1847
    %v1912 = vmin.f32 %v1656, %v1848
    %v1913 = vmin.f32 %v1657, %v1849
    %v1914 = vmin.f32 %v1658, %v1850
    %v1915 = vmin.f32 %v1659, %v1851
    %v1916 = vmin.f32 %v1660, %v1852
    %v1917 = vmin.f32 %v1661, %v1853
    %v1918 = vmin.f32 %v1662, %v1854
    %v1919 = vmin.f32 %v1663, %v1855
    %v1920 = vmin.f32 %v1664, %v1856
    %v1921 = vmin.f32 %v1665, %v1857
    %v1922 = vmin.f32 %v1666, %v1858
    %v1923 = vmin.f32 %v1667, %v1859
    %v1924 = vmin.f32 %v1668, %v1860
    %v1925 = vmin.f32 %v1669, %v1861
    %v1926 = vmin.f32 %v1670, %v1862
    %v1927 = vmin.f32 %v1671, %v1863
    %v1928 = vmin.f32 %v1672, %v1864
    %v1929 = vmin.f32 %v1673, %v1865
    %v1930 = vmin.f32 %v1674, %v1866
    %v1931 = vmin.f32 %v1419, %v1867
    %v1932 = vmin.f32 %v1420, %v1868
    %v1933 = vmin.f32 %v1421, %v1869
    %v1934 = vmin.f32 %v1422, %v1870
    %v1935 = vmin.f32 %v1423, %v1871
    %v1936 = vmin.f32 %v1424, %v1872
    %v1937 = vmin.f32 %v1425, %v1873
    %v1938 = vmin.f32 %v1426, %v1874
    %v1939 = vmin.f32 %v1427, %v1875
    %v1940 = vmin.f32 %v1428, %v1876
    %v1941 = vmin.f32 %v1429, %v1877
    %v1942 = vmin.f32 %v1430, %v1878
    %v1943 = vmin.f32 %v1431, %v1879
    %v1944 = vmin.f32 %v1432, %v1880
    %v1945 = vmin.f32 %v1433, %v1881
    %v1946 = vmin.f32 %v1434, %v1882
    %v1947 = vmin.f32 %v1435, %v1883
    %v1948 = vmin.f32 %v1436, %v1884
    %v1949 = vmin.f32 %v1437, %v1885
    %v1950 = vmin.f32 %v1438, %v1886
    %v1951 = vmin.f32 %v1439, %v1887
    %v1952 = vmin.f32 %v1440, %v1888
    %v1953 = vmin.f32 %v1441, %v1889
    %v1954 = vmin.f32 %v1442, %v1890
    %v1955 = vmin.f32 %v1443, %v1891
    %v1956 = vmin.f32 %v1444, %v1892
    %v1957 = vmin.f32 %v1445, %v1893
    %v1958 = vmin.f32 %v1446, %v1894
    %v1959 = vmin.f32 %v1447, %v1895
    %v1960 = vmin.f32 %v1448, %v1896
    %v1961 = vmin.f32 %v1449, %v1897
    %v1962 = vmin.f32 %v1450, %v1898
    %v1963 = vmin.f32 %v1451, %v1899
    %v1964 = vmin.f32 %v1452, %v1900
    %v1965 = vmin.f32 %v1453, %v1901
    %v1966 = vmin.f32 %v1454, %v1902
    %v1967 = vmin.f32 %v1455, %v1903
    %v1968 = vmin.f32 %v1456, %v1904
    %v1969 = vmin.f32 %v1457, %v1905
    %v1970 = vmin.f32 %v1458, %v1906
    %v1971 = vmin.f32 %v1459, %v1907
    %v1972 = vmin.f32 %v1460, %v1908
    %v1973 = vmin.f32 %v1461, %v1909
    %v1974 = vmin.f32 %v1462, %v1910
    %v1975 = vmin.f32 %v1463, %v1911
    %v1976 = vmin.f32 %v1464, %v1912
    %v1977 = vmin.f32 %v1465, %v1913
    %v1978 = vmin.f32 %v1466, %v1914
    %v1979 = vmin.f32 %v1467, %v1915
    %v1980 = vmin.f32 %v1468, %v1916
    %v1981 = vmin.f32 %v1469, %v1917
    %v1982 = vmin.f32 %v1470, %v1918
    %v1983 = vmin.f32 %v1471, %v1919
    %v1984 = vmin.f32 %v1472, %v1920
    %v1985 = vmin.f32 %v1473, %v1921
    %v1986 = vmin.f32 %v1474, %v1922
    %v1987 = vmin.f32 %v1475, %v1923
    %v1988 = vmin.f32 %v1476, %v1924
    %v1989 = vmin.f32 %v1477, %v1925
    %v1990 = vmin.f32 %v1478, %v1926
    %v1991 = vmin.f32 %v1479, %v1927
    %v1992 = vmin.f32 %v1480, %v1928
    %v1993 = vmin.f32 %v1481, %v1929
    %v1994 = vmin.f32 %v1482, %v1930
    %1995 = vrot.lane.b32.xlu0 %v1931, 1
    %v1996 = vpop.permute.xlu0 %1995
    %1997 = vrot.lane.b32.xlu0 %v1933, 1
    %v1998 = vpop.permute.xlu0 %1997
    %1999 = vrot.lane.b32.xlu0 %v1935, 1
    %v2000 = vpop.permute.xlu0 %1999
    %2001 = vrot.lane.b32.xlu0 %v1937, 1
    %v2002 = vpop.permute.xlu0 %2001
    %2003 = vrot.lane.b32.xlu0 %v1939, 1
    %v2004 = vpop.permute.xlu0 %2003
    %2005 = vrot.lane.b32.xlu0 %v1941, 1
    %v2006 = vpop.permute.xlu0 %2005
    %2007 = vrot.lane.b32.xlu0 %v1943, 1
    %v2008 = vpop.permute.xlu0 %2007
    %2009 = vrot.lane.b32.xlu0 %v1945, 1
    %v2010 = vpop.permute.xlu0 %2009
    %2011 = vrot.lane.b32.xlu0 %v1947, 1
    %v2012 = vpop.permute.xlu0 %2011
    %2013 = vrot.lane.b32.xlu0 %v1949, 1
    %v2014 = vpop.permute.xlu0 %2013
    %2015 = vrot.lane.b32.xlu0 %v1951, 1
    %v2016 = vpop.permute.xlu0 %2015
    %2017 = vrot.lane.b32.xlu0 %v1953, 1
    %v2018 = vpop.permute.xlu0 %2017
    %2019 = vrot.lane.b32.xlu0 %v1955, 1
    %v2020 = vpop.permute.xlu0 %2019
    %2021 = vrot.lane.b32.xlu0 %v1957, 1
    %v2022 = vpop.permute.xlu0 %2021
    %2023 = vrot.lane.b32.xlu0 %v1959, 1
    %v2024 = vpop.permute.xlu0 %2023
    %2025 = vrot.lane.b32.xlu0 %v1961, 1
    %v2026 = vpop.permute.xlu0 %2025
    %2027 = vrot.lane.b32.xlu0 %v1963, 1
    %v2028 = vpop.permute.xlu0 %2027
    %2029 = vrot.lane.b32.xlu0 %v1965, 1
    %v2030 = vpop.permute.xlu0 %2029
    %2031 = vrot.lane.b32.xlu0 %v1967, 1
    %v2032 = vpop.permute.xlu0 %2031
    %2033 = vrot.lane.b32.xlu0 %v1969, 1
    %v2034 = vpop.permute.xlu0 %2033
    %2035 = vrot.lane.b32.xlu0 %v1971, 1
    %v2036 = vpop.permute.xlu0 %2035
    %2037 = vrot.lane.b32.xlu0 %v1973, 1
    %v2038 = vpop.permute.xlu0 %2037
    %2039 = vrot.lane.b32.xlu0 %v1975, 1
    %v2040 = vpop.permute.xlu0 %2039
    %2041 = vrot.lane.b32.xlu0 %v1977, 1
    %v2042 = vpop.permute.xlu0 %2041
    %2043 = vrot.lane.b32.xlu0 %v1979, 1
    %v2044 = vpop.permute.xlu0 %2043
    %2045 = vrot.lane.b32.xlu0 %v1981, 1
    %v2046 = vpop.permute.xlu0 %2045
    %2047 = vrot.lane.b32.xlu0 %v1983, 1
    %v2048 = vpop.permute.xlu0 %2047
    %2049 = vrot.lane.b32.xlu0 %v1985, 1
    %v2050 = vpop.permute.xlu0 %2049
    %2051 = vrot.lane.b32.xlu0 %v1987, 1
    %v2052 = vpop.permute.xlu0 %2051
    %2053 = vrot.lane.b32.xlu0 %v1989, 1
    %v2054 = vpop.permute.xlu0 %2053
    %2055 = vrot.lane.b32.xlu0 %v1991, 1
    %v2056 = vpop.permute.xlu0 %2055
    %2057 = vrot.lane.b32.xlu0 %v1993, 1
    %v2058 = vpop.permute.xlu0 %2057
    %2059 = vrot.lane.b32.xlu0 %v1932, 1
    %v2060 = vpop.permute.xlu0 %2059
    %2061 = vrot.lane.b32.xlu0 %v1934, 1
    %v2062 = vpop.permute.xlu0 %2061
    %2063 = vrot.lane.b32.xlu0 %v1936, 1
    %v2064 = vpop.permute.xlu0 %2063
    %2065 = vrot.lane.b32.xlu0 %v1938, 1
    %v2066 = vpop.permute.xlu0 %2065
    %2067 = vrot.lane.b32.xlu0 %v1940, 1
    %v2068 = vpop.permute.xlu0 %2067
    %2069 = vrot.lane.b32.xlu0 %v1942, 1
    %v2070 = vpop.permute.xlu0 %2069
    %2071 = vrot.lane.b32.xlu0 %v1944, 1
    %v2072 = vpop.permute.xlu0 %2071
    %2073 = vrot.lane.b32.xlu0 %v1946, 1
    %v2074 = vpop.permute.xlu0 %2073
    %2075 = vrot.lane.b32.xlu0 %v1948, 1
    %v2076 = vpop.permute.xlu0 %2075
    %2077 = vrot.lane.b32.xlu0 %v1950, 1
    %v2078 = vpop.permute.xlu0 %2077
    %2079 = vrot.lane.b32.xlu0 %v1952, 1
    %v2080 = vpop.permute.xlu0 %2079
    %2081 = vrot.lane.b32.xlu0 %v1954, 1
    %v2082 = vpop.permute.xlu0 %2081
    %2083 = vrot.lane.b32.xlu0 %v1956, 1
    %v2084 = vpop.permute.xlu0 %2083
    %2085 = vrot.lane.b32.xlu0 %v1958, 1
    %v2086 = vpop.permute.xlu0 %2085
    %2087 = vrot.lane.b32.xlu0 %v1960, 1
    %v2088 = vpop.permute.xlu0 %2087
    %2089 = vrot.lane.b32.xlu0 %v1962, 1
    %v2090 = vpop.permute.xlu0 %2089
    %2091 = vrot.lane.b32.xlu0 %v1964, 1
    %v2092 = vpop.permute.xlu0 %2091
    %2093 = vrot.lane.b32.xlu0 %v1966, 1
    %v2094 = vpop.permute.xlu0 %2093
    %2095 = vrot.lane.b32.xlu0 %v1968, 1
    %v2096 = vpop.permute.xlu0 %2095
    %2097 = vrot.lane.b32.xlu0 %v1970, 1
    %v2098 = vpop.permute.xlu0 %2097
    %2099 = vrot.lane.b32.xlu0 %v1972, 1
    %v2100 = vpop.permute.xlu0 %2099
    %2101 = vrot.lane.b32.xlu0 %v1974, 1
    %v2102 = vpop.permute.xlu0 %2101
    %2103 = vrot.lane.b32.xlu0 %v1976, 1
    %v2104 = vpop.permute.xlu0 %2103
    %2105 = vrot.lane.b32.xlu0 %v1978, 1
    %v2106 = vpop.permute.xlu0 %2105
    %2107 = vrot.lane.b32.xlu0 %v1980, 1
    %v2108 = vpop.permute.xlu0 %2107
    %2109 = vrot.lane.b32.xlu0 %v1982, 1
    %v2110 = vpop.permute.xlu0 %2109
    %2111 = vrot.lane.b32.xlu0 %v1984, 1
    %v2112 = vpop.permute.xlu0 %2111
    %2113 = vrot.lane.b32.xlu0 %v1986, 1
    %v2114 = vpop.permute.xlu0 %2113
    %2115 = vrot.lane.b32.xlu0 %v1988, 1
    %v2116 = vpop.permute.xlu0 %2115
    %2117 = vrot.lane.b32.xlu0 %v1990, 1
    %v2118 = vpop.permute.xlu0 %2117
    %2119 = vrot.lane.b32.xlu0 %v1992, 1
    %v2120 = vpop.permute.xlu0 %2119
    %2121 = vrot.lane.b32.xlu0 %v1994, 1
    %v2122 = vpop.permute.xlu0 %2121
    %v2123 = vsel %vm961, %v1996, %v2060
    %v2124 = vsel %vm961, %v1998, %v2062
    %v2125 = vsel %vm961, %v2000, %v2064
    %v2126 = vsel %vm961, %v2002, %v2066
    %v2127 = vsel %vm961, %v2004, %v2068
    %v2128 = vsel %vm961, %v2006, %v2070
    %v2129 = vsel %vm961, %v2008, %v2072
    %v2130 = vsel %vm961, %v2010, %v2074
    %v2131 = vsel %vm961, %v2012, %v2076
    %v2132 = vsel %vm961, %v2014, %v2078
    %v2133 = vsel %vm961, %v2016, %v2080
    %v2134 = vsel %vm961, %v2018, %v2082
    %v2135 = vsel %vm961, %v2020, %v2084
    %v2136 = vsel %vm961, %v2022, %v2086
    %v2137 = vsel %vm961, %v2024, %v2088
    %v2138 = vsel %vm961, %v2026, %v2090
    %v2139 = vsel %vm961, %v2028, %v2092
    %v2140 = vsel %vm961, %v2030, %v2094
    %v2141 = vsel %vm961, %v2032, %v2096
    %v2142 = vsel %vm961, %v2034, %v2098
    %v2143 = vsel %vm961, %v2036, %v2100
    %v2144 = vsel %vm961, %v2038, %v2102
    %v2145 = vsel %vm961, %v2040, %v2104
    %v2146 = vsel %vm961, %v2042, %v2106
    %v2147 = vsel %vm961, %v2044, %v2108
    %v2148 = vsel %vm961, %v2046, %v2110
    %v2149 = vsel %vm961, %v2048, %v2112
    %v2150 = vsel %vm961, %v2050, %v2114
    %v2151 = vsel %vm961, %v2052, %v2116
    %v2152 = vsel %vm961, %v2054, %v2118
    %v2153 = vsel %vm961, %v2056, %v2120
    %v2154 = vsel %vm961, %v2058, %v2122
    %v2155 = vsel %vm961, %v2060, %v1996
    %v2156 = vsel %vm961, %v2062, %v1998
    %v2157 = vsel %vm961, %v2064, %v2000
    %v2158 = vsel %vm961, %v2066, %v2002
    %v2159 = vsel %vm961, %v2068, %v2004
    %v2160 = vsel %vm961, %v2070, %v2006
    %v2161 = vsel %vm961, %v2072, %v2008
    %v2162 = vsel %vm961, %v2074, %v2010
    %v2163 = vsel %vm961, %v2076, %v2012
    %v2164 = vsel %vm961, %v2078, %v2014
    %v2165 = vsel %vm961, %v2080, %v2016
    %v2166 = vsel %vm961, %v2082, %v2018
    %v2167 = vsel %vm961, %v2084, %v2020
    %v2168 = vsel %vm961, %v2086, %v2022
    %v2169 = vsel %vm961, %v2088, %v2024
    %v2170 = vsel %vm961, %v2090, %v2026
    %v2171 = vsel %vm961, %v2092, %v2028
    %v2172 = vsel %vm961, %v2094, %v2030
    %v2173 = vsel %vm961, %v2096, %v2032
    %v2174 = vsel %vm961, %v2098, %v2034
    %v2175 = vsel %vm961, %v2100, %v2036
    %v2176 = vsel %vm961, %v2102, %v2038
    %v2177 = vsel %vm961, %v2104, %v2040
    %v2178 = vsel %vm961, %v2106, %v2042
    %v2179 = vsel %vm961, %v2108, %v2044
    %v2180 = vsel %vm961, %v2110, %v2046
    %v2181 = vsel %vm961, %v2112, %v2048
    %v2182 = vsel %vm961, %v2114, %v2050
    %v2183 = vsel %vm961, %v2116, %v2052
    %v2184 = vsel %vm961, %v2118, %v2054
    %v2185 = vsel %vm961, %v2120, %v2056
    %v2186 = vsel %vm961, %v2122, %v2058
    %v2187 = vsel %vm1028, %v2155, 1.0
    %v2188 = vsel %vm1029, %v2123, 1.0
    %v2189 = vsel %vm1028, %v2156, 1.0
    %v2190 = vsel %vm1029, %v2124, 1.0
    %v2191 = vsel %vm1028, %v2157, 1.0
    %v2192 = vsel %vm1029, %v2125, 1.0
    %v2193 = vsel %vm1028, %v2158, 1.0
    %v2194 = vsel %vm1029, %v2126, 1.0
    %v2195 = vsel %vm1028, %v2159, 1.0
    %v2196 = vsel %vm1029, %v2127, 1.0
    %v2197 = vsel %vm1028, %v2160, 1.0
    %v2198 = vsel %vm1029, %v2128, 1.0
    %v2199 = vsel %vm1028, %v2161, 1.0
    %v2200 = vsel %vm1029, %v2129, 1.0
    %v2201 = vsel %vm1028, %v2162, 1.0
    %v2202 = vsel %vm1029, %v2130, 1.0
    %v2203 = vsel %vm1028, %v2163, 1.0
    %v2204 = vsel %vm1029, %v2131, 1.0
    %v2205 = vsel %vm1028, %v2164, 1.0
    %v2206 = vsel %vm1029, %v2132, 1.0
    %v2207 = vsel %vm1028, %v2165, 1.0
    %v2208 = vsel %vm1029, %v2133, 1.0
    %v2209 = vsel %vm1028, %v2166, 1.0
    %v2210 = vsel %vm1029, %v2134, 1.0
    %v2211 = vsel %vm1028, %v2167, 1.0
    %v2212 = vsel %vm1029, %v2135, 1.0
    %v2213 = vsel %vm1028, %v2168, 1.0
    %v2214 = vsel %vm1029, %v2136, 1.0
    %v2215 = vsel %vm1028, %v2169, 1.0
    %v2216 = vsel %vm1029, %v2137, 1.0
    %v2217 = vsel %vm1028, %v2170, 1.0
    %v2218 = vsel %vm1029, %v2138, 1.0
    %v2219 = vsel %vm1028, %v2171, 1.0
    %v2220 = vsel %vm1029, %v2139, 1.0
    %v2221 = vsel %vm1028, %v2172, 1.0
    %v2222 = vsel %vm1029, %v2140, 1.0
    %v2223 = vsel %vm1028, %v2173, 1.0
    %v2224 = vsel %vm1029, %v2141, 1.0
    %v2225 = vsel %vm1028, %v2174, 1.0
    %v2226 = vsel %vm1029, %v2142, 1.0
    %v2227 = vsel %vm1028, %v2175, 1.0
    %v2228 = vsel %vm1029, %v2143, 1.0
    %v2229 = vsel %vm1028, %v2176, 1.0
    %v2230 = vsel %vm1029, %v2144, 1.0
    %v2231 = vsel %vm1028, %v2177, 1.0
    %v2232 = vsel %vm1029, %v2145, 1.0
    %v2233 = vsel %vm1028, %v2178, 1.0
    %v2234 = vsel %vm1029, %v2146, 1.0
    %v2235 = vsel %vm1028, %v2179, 1.0
    %v2236 = vsel %vm1029, %v2147, 1.0
    %v2237 = vsel %vm1028, %v2180, 1.0
    %v2238 = vsel %vm1029, %v2148, 1.0
    %v2239 = vsel %vm1028, %v2181, 1.0
    %v2240 = vsel %vm1029, %v2149, 1.0
    %v2241 = vsel %vm1028, %v2182, 1.0
    %v2242 = vsel %vm1029, %v2150, 1.0
    %v2243 = vsel %vm1028, %v2183, 1.0
    %v2244 = vsel %vm1029, %v2151, 1.0
    %v2245 = vsel %vm1028, %v2184, 1.0
    %v2246 = vsel %vm1029, %v2152, 1.0
    %v2247 = vsel %vm1028, %v2185, 1.0
    %v2248 = vsel %vm1029, %v2153, 1.0
    %v2249 = vsel %vm1028, %v2186, 1.0
    %v2250 = vsel %vm1029, %v2154, 1.0
    %2251 = vrot.lane.b32.xlu0 %v1931, 127
    %v2252 = vpop.permute.xlu0 %2251
    %2253 = vrot.lane.b32.xlu0 %v1933, 127
    %v2254 = vpop.permute.xlu0 %2253
    %2255 = vrot.lane.b32.xlu0 %v1935, 127
    %v2256 = vpop.permute.xlu0 %2255
    %2257 = vrot.lane.b32.xlu0 %v1937, 127
    %v2258 = vpop.permute.xlu0 %2257
    %2259 = vrot.lane.b32.xlu0 %v1939, 127
    %v2260 = vpop.permute.xlu0 %2259
    %2261 = vrot.lane.b32.xlu0 %v1941, 127
    %v2262 = vpop.permute.xlu0 %2261
    %2263 = vrot.lane.b32.xlu0 %v1943, 127
    %v2264 = vpop.permute.xlu0 %2263
    %2265 = vrot.lane.b32.xlu0 %v1945, 127
    %v2266 = vpop.permute.xlu0 %2265
    %2267 = vrot.lane.b32.xlu0 %v1947, 127
    %v2268 = vpop.permute.xlu0 %2267
    %2269 = vrot.lane.b32.xlu0 %v1949, 127
    %v2270 = vpop.permute.xlu0 %2269
    %2271 = vrot.lane.b32.xlu0 %v1951, 127
    %v2272 = vpop.permute.xlu0 %2271
    %2273 = vrot.lane.b32.xlu0 %v1953, 127
    %v2274 = vpop.permute.xlu0 %2273
    %2275 = vrot.lane.b32.xlu0 %v1955, 127
    %v2276 = vpop.permute.xlu0 %2275
    %2277 = vrot.lane.b32.xlu0 %v1957, 127
    %v2278 = vpop.permute.xlu0 %2277
    %2279 = vrot.lane.b32.xlu0 %v1959, 127
    %v2280 = vpop.permute.xlu0 %2279
    %2281 = vrot.lane.b32.xlu0 %v1961, 127
    %v2282 = vpop.permute.xlu0 %2281
    %2283 = vrot.lane.b32.xlu0 %v1963, 127
    %v2284 = vpop.permute.xlu0 %2283
    %2285 = vrot.lane.b32.xlu0 %v1965, 127
    %v2286 = vpop.permute.xlu0 %2285
    %2287 = vrot.lane.b32.xlu0 %v1967, 127
    %v2288 = vpop.permute.xlu0 %2287
    %2289 = vrot.lane.b32.xlu0 %v1969, 127
    %v2290 = vpop.permute.xlu0 %2289
    %2291 = vrot.lane.b32.xlu0 %v1971, 127
    %v2292 = vpop.permute.xlu0 %2291
    %2293 = vrot.lane.b32.xlu0 %v1973, 127
    %v2294 = vpop.permute.xlu0 %2293
    %2295 = vrot.lane.b32.xlu0 %v1975, 127
    %v2296 = vpop.permute.xlu0 %2295
    %2297 = vrot.lane.b32.xlu0 %v1977, 127
    %v2298 = vpop.permute.xlu0 %2297
    %2299 = vrot.lane.b32.xlu0 %v1979, 127
    %v2300 = vpop.permute.xlu0 %2299
    %2301 = vrot.lane.b32.xlu0 %v1981, 127
    %v2302 = vpop.permute.xlu0 %2301
    %2303 = vrot.lane.b32.xlu0 %v1983, 127
    %v2304 = vpop.permute.xlu0 %2303
    %2305 = vrot.lane.b32.xlu0 %v1985, 127
    %v2306 = vpop.permute.xlu0 %2305
    %2307 = vrot.lane.b32.xlu0 %v1987, 127
    %v2308 = vpop.permute.xlu0 %2307
    %2309 = vrot.lane.b32.xlu0 %v1989, 127
    %v2310 = vpop.permute.xlu0 %2309
    %2311 = vrot.lane.b32.xlu0 %v1991, 127
    %v2312 = vpop.permute.xlu0 %2311
    %2313 = vrot.lane.b32.xlu0 %v1993, 127
    %v2314 = vpop.permute.xlu0 %2313
    %2315 = vrot.lane.b32.xlu0 %v1932, 127
    %v2316 = vpop.permute.xlu0 %2315
    %2317 = vrot.lane.b32.xlu0 %v1934, 127
    %v2318 = vpop.permute.xlu0 %2317
    %2319 = vrot.lane.b32.xlu0 %v1936, 127
    %v2320 = vpop.permute.xlu0 %2319
    %2321 = vrot.lane.b32.xlu0 %v1938, 127
    %v2322 = vpop.permute.xlu0 %2321
    %2323 = vrot.lane.b32.xlu0 %v1940, 127
    %v2324 = vpop.permute.xlu0 %2323
    %2325 = vrot.lane.b32.xlu0 %v1942, 127
    %v2326 = vpop.permute.xlu0 %2325
    %2327 = vrot.lane.b32.xlu0 %v1944, 127
    %v2328 = vpop.permute.xlu0 %2327
    %2329 = vrot.lane.b32.xlu0 %v1946, 127
    %v2330 = vpop.permute.xlu0 %2329
    %2331 = vrot.lane.b32.xlu0 %v1948, 127
    %v2332 = vpop.permute.xlu0 %2331
    %2333 = vrot.lane.b32.xlu0 %v1950, 127
    %v2334 = vpop.permute.xlu0 %2333
    %2335 = vrot.lane.b32.xlu0 %v1952, 127
    %v2336 = vpop.permute.xlu0 %2335
    %2337 = vrot.lane.b32.xlu0 %v1954, 127
    %v2338 = vpop.permute.xlu0 %2337
    %2339 = vrot.lane.b32.xlu0 %v1956, 127
    %v2340 = vpop.permute.xlu0 %2339
    %2341 = vrot.lane.b32.xlu0 %v1958, 127
    %v2342 = vpop.permute.xlu0 %2341
    %2343 = vrot.lane.b32.xlu0 %v1960, 127
    %v2344 = vpop.permute.xlu0 %2343
    %2345 = vrot.lane.b32.xlu0 %v1962, 127
    %v2346 = vpop.permute.xlu0 %2345
    %2347 = vrot.lane.b32.xlu0 %v1964, 127
    %v2348 = vpop.permute.xlu0 %2347
    %2349 = vrot.lane.b32.xlu0 %v1966, 127
    %v2350 = vpop.permute.xlu0 %2349
    %2351 = vrot.lane.b32.xlu0 %v1968, 127
    %v2352 = vpop.permute.xlu0 %2351
    %2353 = vrot.lane.b32.xlu0 %v1970, 127
    %v2354 = vpop.permute.xlu0 %2353
    %2355 = vrot.lane.b32.xlu0 %v1972, 127
    %v2356 = vpop.permute.xlu0 %2355
    %2357 = vrot.lane.b32.xlu0 %v1974, 127
    %v2358 = vpop.permute.xlu0 %2357
    %2359 = vrot.lane.b32.xlu0 %v1976, 127
    %v2360 = vpop.permute.xlu0 %2359
    %2361 = vrot.lane.b32.xlu0 %v1978, 127
    %v2362 = vpop.permute.xlu0 %2361
    %2363 = vrot.lane.b32.xlu0 %v1980, 127
    %v2364 = vpop.permute.xlu0 %2363
    %2365 = vrot.lane.b32.xlu0 %v1982, 127
    %v2366 = vpop.permute.xlu0 %2365
    %2367 = vrot.lane.b32.xlu0 %v1984, 127
    %v2368 = vpop.permute.xlu0 %2367
    %2369 = vrot.lane.b32.xlu0 %v1986, 127
    %v2370 = vpop.permute.xlu0 %2369
    %2371 = vrot.lane.b32.xlu0 %v1988, 127
    %v2372 = vpop.permute.xlu0 %2371
    %2373 = vrot.lane.b32.xlu0 %v1990, 127
    %v2374 = vpop.permute.xlu0 %2373
    %2375 = vrot.lane.b32.xlu0 %v1992, 127
    %v2376 = vpop.permute.xlu0 %2375
    %2377 = vrot.lane.b32.xlu0 %v1994, 127
    %v2378 = vpop.permute.xlu0 %2377
    %v2379 = vsel %vm1222, %v2252, %v2316
    %v2380 = vsel %vm1222, %v2254, %v2318
    %v2381 = vsel %vm1222, %v2256, %v2320
    %v2382 = vsel %vm1222, %v2258, %v2322
    %v2383 = vsel %vm1222, %v2260, %v2324
    %v2384 = vsel %vm1222, %v2262, %v2326
    %v2385 = vsel %vm1222, %v2264, %v2328
    %v2386 = vsel %vm1222, %v2266, %v2330
    %v2387 = vsel %vm1222, %v2268, %v2332
    %v2388 = vsel %vm1222, %v2270, %v2334
    %v2389 = vsel %vm1222, %v2272, %v2336
    %v2390 = vsel %vm1222, %v2274, %v2338
    %v2391 = vsel %vm1222, %v2276, %v2340
    %v2392 = vsel %vm1222, %v2278, %v2342
    %v2393 = vsel %vm1222, %v2280, %v2344
    %v2394 = vsel %vm1222, %v2282, %v2346
    %v2395 = vsel %vm1222, %v2284, %v2348
    %v2396 = vsel %vm1222, %v2286, %v2350
    %v2397 = vsel %vm1222, %v2288, %v2352
    %v2398 = vsel %vm1222, %v2290, %v2354
    %v2399 = vsel %vm1222, %v2292, %v2356
    %v2400 = vsel %vm1222, %v2294, %v2358
    %v2401 = vsel %vm1222, %v2296, %v2360
    %v2402 = vsel %vm1222, %v2298, %v2362
    %v2403 = vsel %vm1222, %v2300, %v2364
    %v2404 = vsel %vm1222, %v2302, %v2366
    %v2405 = vsel %vm1222, %v2304, %v2368
    %v2406 = vsel %vm1222, %v2306, %v2370
    %v2407 = vsel %vm1222, %v2308, %v2372
    %v2408 = vsel %vm1222, %v2310, %v2374
    %v2409 = vsel %vm1222, %v2312, %v2376
    %v2410 = vsel %vm1222, %v2314, %v2378
    %v2411 = vsel %vm1222, %v2316, %v2252
    %v2412 = vsel %vm1222, %v2318, %v2254
    %v2413 = vsel %vm1222, %v2320, %v2256
    %v2414 = vsel %vm1222, %v2322, %v2258
    %v2415 = vsel %vm1222, %v2324, %v2260
    %v2416 = vsel %vm1222, %v2326, %v2262
    %v2417 = vsel %vm1222, %v2328, %v2264
    %v2418 = vsel %vm1222, %v2330, %v2266
    %v2419 = vsel %vm1222, %v2332, %v2268
    %v2420 = vsel %vm1222, %v2334, %v2270
    %v2421 = vsel %vm1222, %v2336, %v2272
    %v2422 = vsel %vm1222, %v2338, %v2274
    %v2423 = vsel %vm1222, %v2340, %v2276
    %v2424 = vsel %vm1222, %v2342, %v2278
    %v2425 = vsel %vm1222, %v2344, %v2280
    %v2426 = vsel %vm1222, %v2346, %v2282
    %v2427 = vsel %vm1222, %v2348, %v2284
    %v2428 = vsel %vm1222, %v2350, %v2286
    %v2429 = vsel %vm1222, %v2352, %v2288
    %v2430 = vsel %vm1222, %v2354, %v2290
    %v2431 = vsel %vm1222, %v2356, %v2292
    %v2432 = vsel %vm1222, %v2358, %v2294
    %v2433 = vsel %vm1222, %v2360, %v2296
    %v2434 = vsel %vm1222, %v2362, %v2298
    %v2435 = vsel %vm1222, %v2364, %v2300
    %v2436 = vsel %vm1222, %v2366, %v2302
    %v2437 = vsel %vm1222, %v2368, %v2304
    %v2438 = vsel %vm1222, %v2370, %v2306
    %v2439 = vsel %vm1222, %v2372, %v2308
    %v2440 = vsel %vm1222, %v2374, %v2310
    %v2441 = vsel %vm1222, %v2376, %v2312
    %v2442 = vsel %vm1222, %v2378, %v2314
    %v2443 = vsel %vm1289, %v2379, 1.0
    %v2444 = vsel %vm1290, %v2411, 1.0
    %v2445 = vsel %vm1289, %v2380, 1.0
    %v2446 = vsel %vm1290, %v2412, 1.0
    %v2447 = vsel %vm1289, %v2381, 1.0
    %v2448 = vsel %vm1290, %v2413, 1.0
    %v2449 = vsel %vm1289, %v2382, 1.0
    %v2450 = vsel %vm1290, %v2414, 1.0
    %v2451 = vsel %vm1289, %v2383, 1.0
    %v2452 = vsel %vm1290, %v2415, 1.0
    %v2453 = vsel %vm1289, %v2384, 1.0
    %v2454 = vsel %vm1290, %v2416, 1.0
    %v2455 = vsel %vm1289, %v2385, 1.0
    %v2456 = vsel %vm1290, %v2417, 1.0
    %v2457 = vsel %vm1289, %v2386, 1.0
    %v2458 = vsel %vm1290, %v2418, 1.0
    %v2459 = vsel %vm1289, %v2387, 1.0
    %v2460 = vsel %vm1290, %v2419, 1.0
    %v2461 = vsel %vm1289, %v2388, 1.0
    %v2462 = vsel %vm1290, %v2420, 1.0
    %v2463 = vsel %vm1289, %v2389, 1.0
    %v2464 = vsel %vm1290, %v2421, 1.0
    %v2465 = vsel %vm1289, %v2390, 1.0
    %v2466 = vsel %vm1290, %v2422, 1.0
    %v2467 = vsel %vm1289, %v2391, 1.0
    %v2468 = vsel %vm1290, %v2423, 1.0
    %v2469 = vsel %vm1289, %v2392, 1.0
    %v2470 = vsel %vm1290, %v2424, 1.0
    %v2471 = vsel %vm1289, %v2393, 1.0
    %v2472 = vsel %vm1290, %v2425, 1.0
    %v2473 = vsel %vm1289, %v2394, 1.0
    %v2474 = vsel %vm1290, %v2426, 1.0
    %v2475 = vsel %vm1289, %v2395, 1.0
    %v2476 = vsel %vm1290, %v2427, 1.0
    %v2477 = vsel %vm1289, %v2396, 1.0
    %v2478 = vsel %vm1290, %v2428, 1.0
    %v2479 = vsel %vm1289, %v2397, 1.0
    %v2480 = vsel %vm1290, %v2429, 1.0
    %v2481 = vsel %vm1289, %v2398, 1.0
    %v2482 = vsel %vm1290, %v2430, 1.0
    %v2483 = vsel %vm1289, %v2399, 1.0
    %v2484 = vsel %vm1290, %v2431, 1.0
    %v2485 = vsel %vm1289, %v2400, 1.0
    %v2486 = vsel %vm1290, %v2432, 1.0
    %v2487 = vsel %vm1289, %v2401, 1.0
    %v2488 = vsel %vm1290, %v2433, 1.0
    %v2489 = vsel %vm1289, %v2402, 1.0
    %v2490 = vsel %vm1290, %v2434, 1.0
    %v2491 = vsel %vm1289, %v2403, 1.0
    %v2492 = vsel %vm1290, %v2435, 1.0
    %v2493 = vsel %vm1289, %v2404, 1.0
    %v2494 = vsel %vm1290, %v2436, 1.0
    %v2495 = vsel %vm1289, %v2405, 1.0
    %v2496 = vsel %vm1290, %v2437, 1.0
    %v2497 = vsel %vm1289, %v2406, 1.0
    %v2498 = vsel %vm1290, %v2438, 1.0
    %v2499 = vsel %vm1289, %v2407, 1.0
    %v2500 = vsel %vm1290, %v2439, 1.0
    %v2501 = vsel %vm1289, %v2408, 1.0
    %v2502 = vsel %vm1290, %v2440, 1.0
    %v2503 = vsel %vm1289, %v2409, 1.0
    %v2504 = vsel %vm1290, %v2441, 1.0
    %v2505 = vsel %vm1289, %v2410, 1.0
    %v2506 = vsel %vm1290, %v2442, 1.0
    %v2507 = vmin.f32 %v2187, %v2443
    %v2508 = vmin.f32 %v2188, %v2444
    %v2509 = vmin.f32 %v2189, %v2445
    %v2510 = vmin.f32 %v2190, %v2446
    %v2511 = vmin.f32 %v2191, %v2447
    %v2512 = vmin.f32 %v2192, %v2448
    %v2513 = vmin.f32 %v2193, %v2449
    %v2514 = vmin.f32 %v2194, %v2450
    %v2515 = vmin.f32 %v2195, %v2451
    %v2516 = vmin.f32 %v2196, %v2452
    %v2517 = vmin.f32 %v2197, %v2453
    %v2518 = vmin.f32 %v2198, %v2454
    %v2519 = vmin.f32 %v2199, %v2455
    %v2520 = vmin.f32 %v2200, %v2456
    %v2521 = vmin.f32 %v2201, %v2457
    %v2522 = vmin.f32 %v2202, %v2458
    %v2523 = vmin.f32 %v2203, %v2459
    %v2524 = vmin.f32 %v2204, %v2460
    %v2525 = vmin.f32 %v2205, %v2461
    %v2526 = vmin.f32 %v2206, %v2462
    %v2527 = vmin.f32 %v2207, %v2463
    %v2528 = vmin.f32 %v2208, %v2464
    %v2529 = vmin.f32 %v2209, %v2465
    %v2530 = vmin.f32 %v2210, %v2466
    %v2531 = vmin.f32 %v2211, %v2467
    %v2532 = vmin.f32 %v2212, %v2468
    %v2533 = vmin.f32 %v2213, %v2469
    %v2534 = vmin.f32 %v2214, %v2470
    %v2535 = vmin.f32 %v2215, %v2471
    %v2536 = vmin.f32 %v2216, %v2472
    %v2537 = vmin.f32 %v2217, %v2473
    %v2538 = vmin.f32 %v2218, %v2474
    %v2539 = vmin.f32 %v2219, %v2475
    %v2540 = vmin.f32 %v2220, %v2476
    %v2541 = vmin.f32 %v2221, %v2477
    %v2542 = vmin.f32 %v2222, %v2478
    %v2543 = vmin.f32 %v2223, %v2479
    %v2544 = vmin.f32 %v2224, %v2480
    %v2545 = vmin.f32 %v2225, %v2481
    %v2546 = vmin.f32 %v2226, %v2482
    %v2547 = vmin.f32 %v2227, %v2483
    %v2548 = vmin.f32 %v2228, %v2484
    %v2549 = vmin.f32 %v2229, %v2485
    %v2550 = vmin.f32 %v2230, %v2486
    %v2551 = vmin.f32 %v2231, %v2487
    %v2552 = vmin.f32 %v2232, %v2488
    %v2553 = vmin.f32 %v2233, %v2489
    %v2554 = vmin.f32 %v2234, %v2490
    %v2555 = vmin.f32 %v2235, %v2491
    %v2556 = vmin.f32 %v2236, %v2492
    %v2557 = vmin.f32 %v2237, %v2493
    %v2558 = vmin.f32 %v2238, %v2494
    %v2559 = vmin.f32 %v2239, %v2495
    %v2560 = vmin.f32 %v2240, %v2496
    %v2561 = vmin.f32 %v2241, %v2497
    %v2562 = vmin.f32 %v2242, %v2498
    %v2563 = vmin.f32 %v2243, %v2499
    %v2564 = vmin.f32 %v2244, %v2500
    %v2565 = vmin.f32 %v2245, %v2501
    %v2566 = vmin.f32 %v2246, %v2502
    %v2567 = vmin.f32 %v2247, %v2503
    %v2568 = vmin.f32 %v2248, %v2504
    %v2569 = vmin.f32 %v2249, %v2505
    %v2570 = vmin.f32 %v2250, %v2506
    %v2571 = vmin.f32 %v1931, %v2507
    %v2572 = vmin.f32 %v1932, %v2508
    %v2573 = vmin.f32 %v1933, %v2509
    %v2574 = vmin.f32 %v1934, %v2510
    %v2575 = vmin.f32 %v1935, %v2511
    %v2576 = vmin.f32 %v1936, %v2512
    %v2577 = vmin.f32 %v1937, %v2513
    %v2578 = vmin.f32 %v1938, %v2514
    %v2579 = vmin.f32 %v1939, %v2515
    %v2580 = vmin.f32 %v1940, %v2516
    %v2581 = vmin.f32 %v1941, %v2517
    %v2582 = vmin.f32 %v1942, %v2518
    %v2583 = vmin.f32 %v1943, %v2519
    %v2584 = vmin.f32 %v1944, %v2520
    %v2585 = vmin.f32 %v1945, %v2521
    %v2586 = vmin.f32 %v1946, %v2522
    %v2587 = vmin.f32 %v1947, %v2523
    %v2588 = vmin.f32 %v1948, %v2524
    %v2589 = vmin.f32 %v1949, %v2525
    %v2590 = vmin.f32 %v1950, %v2526
    %v2591 = vmin.f32 %v1951, %v2527
    %v2592 = vmin.f32 %v1952, %v2528
    %v2593 = vmin.f32 %v1953, %v2529
    %v2594 = vmin.f32 %v1954, %v2530
    %v2595 = vmin.f32 %v1955, %v2531
    %v2596 = vmin.f32 %v1956, %v2532
    %v2597 = vmin.f32 %v1957, %v2533
    %v2598 = vmin.f32 %v1958, %v2534
    %v2599 = vmin.f32 %v1959, %v2535
    %v2600 = vmin.f32 %v1960, %v2536
    %v2601 = vmin.f32 %v1961, %v2537
    %v2602 = vmin.f32 %v1962, %v2538
    %v2603 = vmin.f32 %v1963, %v2539
    %v2604 = vmin.f32 %v1964, %v2540
    %v2605 = vmin.f32 %v1965, %v2541
    %v2606 = vmin.f32 %v1966, %v2542
    %v2607 = vmin.f32 %v1967, %v2543
    %v2608 = vmin.f32 %v1968, %v2544
    %v2609 = vmin.f32 %v1969, %v2545
    %v2610 = vmin.f32 %v1970, %v2546
    %v2611 = vmin.f32 %v1971, %v2547
    %v2612 = vmin.f32 %v1972, %v2548
    %v2613 = vmin.f32 %v1973, %v2549
    %v2614 = vmin.f32 %v1974, %v2550
    %v2615 = vmin.f32 %v1975, %v2551
    %v2616 = vmin.f32 %v1976, %v2552
    %v2617 = vmin.f32 %v1977, %v2553
    %v2618 = vmin.f32 %v1978, %v2554
    %v2619 = vmin.f32 %v1979, %v2555
    %v2620 = vmin.f32 %v1980, %v2556
    %v2621 = vmin.f32 %v1981, %v2557
    %v2622 = vmin.f32 %v1982, %v2558
    %v2623 = vmin.f32 %v1983, %v2559
    %v2624 = vmin.f32 %v1984, %v2560
    %v2625 = vmin.f32 %v1985, %v2561
    %v2626 = vmin.f32 %v1986, %v2562
    %v2627 = vmin.f32 %v1987, %v2563
    %v2628 = vmin.f32 %v1988, %v2564
    %v2629 = vmin.f32 %v1989, %v2565
    %v2630 = vmin.f32 %v1990, %v2566
    %v2631 = vmin.f32 %v1991, %v2567
    %v2632 = vmin.f32 %v1992, %v2568
    %v2633 = vmin.f32 %v1993, %v2569
    %v2634 = vmin.f32 %v1994, %v2570
    %2635 = vst [vmem:[#allocation5] sm:$0xff] %v2571
    %2636 = vst [vmem:[#allocation5 + $0x8] sm:$0xff] %v2572
    %2637 = vst [vmem:[#allocation5 + $0x10] sm:$0xff] %v2573
    %2638 = vst [vmem:[#allocation5 + $0x18] sm:$0xff] %v2574
    %2639 = vst [vmem:[#allocation5 + $0x20] sm:$0xff] %v2575
    %2640 = vst [vmem:[#allocation5 + $0x28] sm:$0xff] %v2576
    %2641 = vst [vmem:[#allocation5 + $0x30] sm:$0xff] %v2577
    %2642 = vst [vmem:[#allocation5 + $0x38] sm:$0xff] %v2578
    %2643 = vst [vmem:[#allocation5 + $0x40] sm:$0xff] %v2579
    %2644 = vst [vmem:[#allocation5 + $0x48] sm:$0xff] %v2580
    %2645 = vst [vmem:[#allocation5 + $0x50] sm:$0xff] %v2581
    %2646 = vst [vmem:[#allocation5 + $0x58] sm:$0xff] %v2582
    %2647 = vst [vmem:[#allocation5 + $0x60] sm:$0xff] %v2583
    %2648 = vst [vmem:[#allocation5 + $0x68] sm:$0xff] %v2584
    %2649 = vst [vmem:[#allocation5 + $0x70] sm:$0xff] %v2585
    %2650 = vst [vmem:[#allocation5 + $0x78] sm:$0xff] %v2586
    %2651 = vst [vmem:[#allocation5 + $0x80] sm:$0xff] %v2587
    %2652 = vst [vmem:[#allocation5 + $0x88] sm:$0xff] %v2588
    %2653 = vst [vmem:[#allocation5 + $0x90] sm:$0xff] %v2589
    %2654 = vst [vmem:[#allocation5 + $0x98] sm:$0xff] %v2590
    %2655 = vst [vmem:[#allocation5 + $0xa0] sm:$0xff] %v2591
    %2656 = vst [vmem:[#allocation5 + $0xa8] sm:$0xff] %v2592
    %2657 = vst [vmem:[#allocation5 + $0xb0] sm:$0xff] %v2593
    %2658 = vst [vmem:[#allocation5 + $0xb8] sm:$0xff] %v2594
    %2659 = vst [vmem:[#allocation5 + $0xc0] sm:$0xff] %v2595
    %2660 = vst [vmem:[#allocation5 + $0xc8] sm:$0xff] %v2596
    %2661 = vst [vmem:[#allocation5 + $0xd0] sm:$0xff] %v2597
    %2662 = vst [vmem:[#allocation5 + $0xd8] sm:$0xff] %v2598
    %2663 = vst [vmem:[#allocation5 + $0xe0] sm:$0xff] %v2599
    %2664 = vst [vmem:[#allocation5 + $0xe8] sm:$0xff] %v2600
    %2665 = vst [vmem:[#allocation5 + $0xf0] sm:$0xff] %v2601
    %2666 = vst [vmem:[#allocation5 + $0xf8] sm:$0xff] %v2602
    %2667 = vst [vmem:[#allocation5 + $0x100] sm:$0xff] %v2603
    %2668 = vst [vmem:[#allocation5 + $0x108] sm:$0xff] %v2604
    %2669 = vst [vmem:[#allocation5 + $0x110] sm:$0xff] %v2605
    %2670 = vst [vmem:[#allocation5 + $0x118] sm:$0xff] %v2606
    %2671 = vst [vmem:[#allocation5 + $0x120] sm:$0xff] %v2607
    %2672 = vst [vmem:[#allocation5 + $0x128] sm:$0xff] %v2608
    %2673 = vst [vmem:[#allocation5 + $0x130] sm:$0xff] %v2609
    %2674 = vst [vmem:[#allocation5 + $0x138] sm:$0xff] %v2610
    %2675 = vst [vmem:[#allocation5 + $0x140] sm:$0xff] %v2611
    %2676 = vst [vmem:[#allocation5 + $0x148] sm:$0xff] %v2612
    %2677 = vst [vmem:[#allocation5 + $0x150] sm:$0xff] %v2613
    %2678 = vst [vmem:[#allocation5 + $0x158] sm:$0xff] %v2614
    %2679 = vst [vmem:[#allocation5 + $0x160] sm:$0xff] %v2615
    %2680 = vst [vmem:[#allocation5 + $0x168] sm:$0xff] %v2616
    %2681 = vst [vmem:[#allocation5 + $0x170] sm:$0xff] %v2617
    %2682 = vst [vmem:[#allocation5 + $0x178] sm:$0xff] %v2618
    %2683 = vst [vmem:[#allocation5 + $0x180] sm:$0xff] %v2619
    %2684 = vst [vmem:[#allocation5 + $0x188] sm:$0xff] %v2620
    %2685 = vst [vmem:[#allocation5 + $0x190] sm:$0xff] %v2621
    %2686 = vst [vmem:[#allocation5 + $0x198] sm:$0xff] %v2622
    %2687 = vst [vmem:[#allocation5 + $0x1a0] sm:$0xff] %v2623
    %2688 = vst [vmem:[#allocation5 + $0x1a8] sm:$0xff] %v2624
    %2689 = vst [vmem:[#allocation5 + $0x1b0] sm:$0xff] %v2625
    %2690 = vst [vmem:[#allocation5 + $0x1b8] sm:$0xff] %v2626
    %2691 = vst [vmem:[#allocation5 + $0x1c0] sm:$0xff] %v2627
    %2692 = vst [vmem:[#allocation5 + $0x1c8] sm:$0xff] %v2628
    %2693 = vst [vmem:[#allocation5 + $0x1d0] sm:$0xff] %v2629
    %2694 = vst [vmem:[#allocation5 + $0x1d8] sm:$0xff] %v2630
    %2695 = vst [vmem:[#allocation5 + $0x1e0] sm:$0xff] %v2631
    %2696 = vst [vmem:[#allocation5 + $0x1e8] sm:$0xff] %v2632
    %2697 = vst [vmem:[#allocation5 + $0x1f0] sm:$0xff] %v2633
    %2698 = vst [vmem:[#allocation5 + $0x1f8] sm:$0xff] %v2634
    // Predicated region
    $region10: #{tpu_custom_call.1} parent=1 // pred_check
      _
    $region11: #{tpu_custom_call.1} parent=1 // pred_check_branch
      %2700 = sbr.rel (0) target = $region13
    $region12: #{tpu_custom_call.1} parent=1 // pred_region
      %s2702 = ssub.s32 8192, 8192
      %2703 = vsyncadd [#allocation4], %s2702
      %s2704 = sshll.u32 [#allocation5], 4
      %s2705 = int_to_ptr.vmem [resolvable:$true] %s2704
      %2710 = dma.vmem_to_hbm [thread:$0]  %s2705, 8192, %s1, [#allocation4], 256, 256, 16
    $region13: #{tpu_custom_call.1} parent=1 // pred_fallthru
      _
    // Predicated region
    $region14: #{tpu_custom_call.1} parent=1 // pred_check
      _
    $region15: #{tpu_custom_call.1} parent=1 // pred_check_branch
      %2712 = sbr.rel (0) target = $region17
    $region16: #{tpu_custom_call.1} parent=1 // pred_region
      %2713 = dma.done [#allocation4], 8192
    $region17: #{tpu_custom_call.1} parent=1 // pred_fallthru
      _
    %2714 = vsyncpa [#allocation3], 1
    %2715 = vsyncpa [#allocation4], 1

</llo_original>
